<compile_context>
chip_gen: v6e
topology: v6e:2x2x1
jax: 0.10.0
libtpu: 0.0.40
codegen_flags: <defaults>
</compile_context>

<pallas_src>
import numpy as np
import jax
import jax.numpy as jnp
from jax import lax
from jax.experimental import pallas as pl
from jax.experimental.pallas import tpu as pltpu

# ----------------------------- model hyper-params ---------------------------
C_IN = 3                      # input image channels
IMG = 32                      # input image spatial size (H = W)
PATCH = 16                    # patch size of the synthetic image encoder
D = 64                        # embedding dim
D_UP = 8                      # upscaled-embedding channel dim in the decoder
HF = IMG // PATCH             # feature-map spatial size (2)
S = HF * HF                   # number of image tokens (4)
T = 3                         # mask token + 2 box-corner tokens
PPD = C_IN * PATCH * PATCH    # patch-embedding input dim (768)
W64_ROWS = PPD + 5 * D        # packed (K,64) weight slab rows (1088)


# ------------------- bilinear interpolation weight matrices ------------------
def _resize_matrix(in_size, out_size):
    """Exact PyTorch F.interpolate(mode='bilinear', align_corners=False)
    weights along one axis, as an (out_size, in_size) numpy matrix."""
    w = np.zeros((out_size, in_size), dtype=np.float32)
    if in_size == out_size:
        np.fill_diagonal(w, 1.0)
        return w
    scale = in_size / out_size
    for i in range(out_size):
        src = (i + 0.5) * scale - 0.5
        src = max(src, 0.0)
        i0 = min(int(np.floor(src)), in_size - 1)
        i1 = min(i0 + 1, in_size - 1)
        frac = src - i0
        w[i, i0] += 1.0 - frac
        w[i, i1] += frac
    return w


# Static resize operators (size-only, computed once at import time).
_UP512 = _resize_matrix(IMG, 512)                              # (512, 32)  32 -> 512
_DN2 = _resize_matrix(256, HF) @ _resize_matrix(512, 256)      # (2, 512)   512 -> 256 -> 2
_FIN = _resize_matrix(8, IMG) @ _resize_matrix(HF, 8)          # (32, 2)    2 -> 8 -> 32

# Every bilinear-resize row sums to 1, which is what makes folding the conv
# bias / hypernetwork channel bias through the resizes exact.
assert np.allclose(_UP512.sum(1), 1.0) and np.allclose(_FIN.sum(1), 1.0)

# Sparse support of the composed 512->256->2 downsample: each output entry only
# reads ~8 source rows/cols, so tanh only ever needs to be evaluated there.
_SEL = np.where(np.abs(_DN2).max(axis=0) > 1e-12)[0]
assert _SEL.size <= 8, _SEL.size
_UP_SEL = np.zeros((8, IMG), np.float32)
_UP_SEL[:_SEL.size] = _UP512[_SEL]                              # (8, 32)
_DN_SEL = np.zeros((HF, 8), np.float32)
_DN_SEL[:, :_SEL.size] = _DN2[:, _SEL]                          # (2, 8)
_DNH4 = np.ascontiguousarray(_DN_SEL[[0, 0, 1, 1], :])          # (4, 8)
_DNW4 = np.ascontiguousarray(_DN_SEL[[0, 1, 0, 1], :])          # (4, 8)

# Composed 2->8->32 upsample of the predicted mask field, re-laid-out so the
# kernel emits one lane-dense (8,128) vreg:  out8[r, 32q+j] = ori[4r+q, j].
_A_UP = _FIN[:, [0, 0, 1, 1]]                                   # (32, 4)
_BT_UP = _FIN[:, [0, 1, 0, 1]].T                                # (4, 32)
_CMAT = np.zeros((32, 128), np.float32)
for _m in range(4):
    _CMAT[8 * _m:8 * (_m + 1)] = np.kron(_A_UP[:, _m].reshape(8, 4),
                                         _BT_UP[_m:_m + 1, :])

_ys = (np.arange(HF, dtype=np.float32) + 0.5) / HF
_PE_GRID = (np.stack(np.meshgrid(_ys, _ys, indexing="ij"), axis=-1)
              .reshape(S, 2).astype(np.float32))                # (4, 2)

# ---------------------------- VEC slab row layout ----------------------------
(_R_BPATCH, _R_BNECK, _R_BQ, _R_BO, _R_BH1,
 _R_BHU, _R_WHB, _R_WMASK, _R_BMASK) = range(9)
_R_UPSEL = 16        # 8 rows, cols [0:32)
_R_DNH = 24          # 4 rows, cols [0:8)
_R_DNW = 32          # 4 rows, cols [0:8)
_VEC_ROWS = 40


# ========================= the single fused kernel ===========================
def _glom_kernel(scal_ref, img_ref, patch_ref, tok_ref, w64_ref, wkvb_ref,
                 vec_ref, cmat_ref, o_ref):
    f32 = jnp.float32
    cT = (((1,), (1,)), ((), ()))          # contract last-with-last: x @ y.T

    vec = vec_ref[...]                                           # (40, 64)
    b_patch = vec[_R_BPATCH:_R_BPATCH + 1]
    b_neck = vec[_R_BNECK:_R_BNECK + 1]
    b_q = vec[_R_BQ:_R_BQ + 1]
    b_o = vec[_R_BO:_R_BO + 1]
    b_h1 = vec[_R_BH1:_R_BH1 + 1]
    b_hu = vec[_R_BHU:_R_BHU + 1]
    w_hb = vec[_R_WHB:_R_WHB + 1]
    w_mask = vec[_R_WMASK:_R_WMASK + 1]
    b_mask = vec[_R_BMASK:_R_BMASK + 1]
    up_sel = vec[_R_UPSEL:_R_UPSEL + 8, 0:IMG]                   # (8, 32)
    dn_h = vec[_R_DNH:_R_DNH + 4, 0:8]                           # (4, 8)
    dn_w = vec[_R_DNW:_R_DNW + 4, 0:8]                           # (4, 8)

    # --- rough-mask path, sparse-sampled (exact): tanh only where the composed
    #     512->256->2 downsample actually reads it -----------------------------
    y32 = (scal_ref[0] * img_ref[0, 0] + scal_ref[1] * img_ref[0, 1]
           + scal_ref[2] * img_ref[0, 2] + scal_ref[3])          # (32, 32)
    t = jnp.dot(up_sel, y32, preferred_element_type=f32)         # (8, 32)
    p8 = lax.dot_general(t, up_sel, cT, preferred_element_type=f32)  # (8, 8)
    t8 = jnp.tanh(p8)
    m_col = jnp.sum(jnp.dot(dn_h, t8, preferred_element_type=f32) * dn_w,
                    axis=-1, keepdims=True)                      # (4, 1)
    dense = m_col * w_mask + b_mask                               # (4, 64)

    # --- image encoder: patch embed -> ReLU -> 1x1 neck -----------------------
    patches = patch_ref[0]                                        # (4, 768)
    emb = jnp.dot(patches, w64_ref[0:PPD, :],
                  preferred_element_type=f32) + b_patch
    emb = jnp.maximum(emb, 0.0)
    emb = jnp.dot(emb, w64_ref[PPD:PPD + D, :],
                  preferred_element_type=f32) + b_neck            # (4, 64)
    src = emb + dense                                             # (4, 64)

    # --- cross attention (q pre-scaled by 1/sqrt(D); k/v merged, pos folded
    #     into the k bias host-side) ------------------------------------------
    tokens = tok_ref[0]                                           # (3, 64)
    q = jnp.dot(tokens, w64_ref[PPD + D:PPD + 2 * D, :],
                preferred_element_type=f32) + b_q                 # (3, 64)
    kv = jnp.dot(src, wkvb_ref[0:D, :],
                 preferred_element_type=f32) + wkvb_ref[D:D + S, :]   # (4, 128)
    k = kv[:, 0:D]
    v = kv[:, D:2 * D]
    s = lax.dot_general(q, k, cT, preferred_element_type=f32)     # (3, 4)
    p = jnp.exp(s - jnp.max(s, axis=-1, keepdims=True))
    pr = p * pl.reciprocal(jnp.sum(p, axis=-1, keepdims=True), approx=True)
    attn = jnp.dot(pr, v, preferred_element_type=f32)             # (3, 64)
    tok2 = tokens + jnp.dot(attn, w64_ref[PPD + 2 * D:PPD + 3 * D, :],
                            preferred_element_type=f32) + b_o

    # --- hypernetwork MLP on the mask token, with w_up/b_up folded (exact) ----
    mt = tok2[0:1, :]                                             # (1, 64)
    h = jnp.maximum(jnp.dot(mt, w64_ref[PPD + 3 * D:PPD + 4 * D, :],
                            preferred_element_type=f32) + b_h1, 0.0)
    wvec = jnp.dot(h, w64_ref[PPD + 4 * D:PPD + 5 * D, :],
                   preferred_element_type=f32) + b_hu             # (1, 64)
    bsc = jnp.sum(h * w_hb, axis=-1, keepdims=True) + scal_ref[4]  # (1, 1)
    field = lax.dot_general(wvec, src, cT, preferred_element_type=f32)  # (1, 4)

    # --- composed 2->8->32 upsample, emitted lane-dense as one (8,128) vreg ---
    cm = cmat_ref[...]                                            # (32, 128)
    out8 = (field[0:1, 0:1] * cm[0:8] + field[0:1, 1:2] * cm[8:16]
            + field[0:1, 2:3] * cm[16:24] + field[0:1, 3:4] * cm[24:32] + bsc)
    o_ref[0] = out8


# ------------------------------- XLA glue ------------------------------------
def _pe_encode(coords01, gauss):
    """Random-Fourier positional encoding of (N, 2) coords in [0, 1] -> (N, D)."""
    proj = (2.0 * coords01 - 1.0) @ gauss * (2.0 * np.pi)
    return jnp.concatenate([jnp.sin(proj), jnp.cos(proj)], axis=-1)


# ------------------------------- GlomSAM forward ------------------------------
def glom_sam_forward(packed, image, box):
    B, C, H, W = image.shape
    assert (C, H, W) == (C_IN, IMG, IMG)
    Hf, Wf = H // PATCH, W // PATCH

    # ViT im2col for the patch embedding (tiny XLA transpose/reshape)
    patches = (image.reshape(B, C, Hf, PATCH, Wf, PATCH)
                    .transpose(0, 2, 4, 1, 3, 5)
                    .reshape(B, Hf * Wf, C * PATCH * PATCH))      # (B, S, 768)

    # prompt-encoder sparse tokens (box corners): a few hundred XLA flops
    corners = box.reshape(B, 2, 2) / jnp.asarray([[W, H]], jnp.float32)
    sparse = _pe_encode(corners.reshape(B * 2, 2), packed["pe_gauss"])
    sparse = sparse.reshape(B, 2, D) + packed["corner_embed"][None]
    tokens = jnp.concatenate(
        [jnp.broadcast_to(packed["mask_token"][None], (B, 1, D)), sparse], axis=1)

    out8 = pl.pallas_call(
        _glom_kernel,
        out_shape=jax.ShapeDtypeStruct((B, 8, 128), jnp.float32),
        grid=(B,),
        in_specs=[
            pl.BlockSpec(memory_space=pltpu.MemorySpace.SMEM),        # scal (8,)
            pl.BlockSpec((1, C_IN, IMG, IMG), lambda b: (b, 0, 0, 0)),  # image
            pl.BlockSpec((1, S, PPD), lambda b: (b, 0, 0)),             # patches
            pl.BlockSpec((1, T, D), lambda b: (b, 0, 0)),               # tokens
            pl.BlockSpec((W64_ROWS, D), lambda b: (0, 0)),              # W64 slab
            pl.BlockSpec((72, 2 * D), lambda b: (0, 0)),                # WKVB slab
            pl.BlockSpec((_VEC_ROWS, D), lambda b: (0, 0)),             # VEC slab
            pl.BlockSpec((32, 128), lambda b: (0, 0)),                  # CMAT slab
        ],
        out_specs=pl.BlockSpec((1, 8, 128), lambda b: (b, 0, 0)),
        compiler_params=pltpu.CompilerParams(
            dimension_semantics=("parallel",)),
    )(packed["scal"], image, patches, tokens,
      packed["w64"], packed["wkvb"], packed["vec"], packed["cmat"])

    # lane-dense (8,128) block is exactly the row-major (32,32) mask
    return out8.reshape(B, 1, IMG, IMG)


# ----------------------------------- params -----------------------------------
def init_params(key):
    ks = jax.random.split(key, 20)
    f32 = jnp.float32
    p = {
        "rough_w": jax.random.normal(ks[0], (C_IN,), f32) * 0.1,
        "rough_b": jnp.zeros((1,), f32),
        "w_patch": jax.random.normal(ks[1], (PPD, D), f32) * 0.02,
        "b_patch": jnp.zeros((1, D), f32),
        "w_neck": jax.random.normal(ks[2], (D, D), f32) * 0.05,
        "b_neck": jnp.zeros((1, D), f32),
        "pe_gauss": jax.random.normal(ks[3], (2, D // 2), f32),
        "corner_embed": jax.random.normal(ks[4], (2, D), f32) * 0.02,
        "w_mask": jax.random.normal(ks[5], (1, D), f32) * 0.1,
        "b_mask": jnp.zeros((1, D), f32),
        "mask_token": jax.random.normal(ks[6], (1, D), f32) * 0.02,
        "wq": jax.random.normal(ks[7], (D, D), f32) * 0.05,
        "bq": jnp.zeros((1, D), f32),
        "wk": jax.random.normal(ks[8], (D, D), f32) * 0.05,
        "bk": jnp.zeros((1, D), f32),
        "wv": jax.random.normal(ks[9], (D, D), f32) * 0.05,
        "bv": jnp.zeros((1, D), f32),
        "wo": jax.random.normal(ks[10], (D, D), f32) * 0.05,
        "bo": jnp.zeros((1, D), f32),
        "w_hyper1": jax.random.normal(ks[11], (D, D), f32) * 0.05,
        "b_hyper1": jnp.zeros((1, D), f32),
        "w_hyper2": jax.random.normal(ks[12], (D, D_UP), f32) * 0.05,
        "b_hyper2": jnp.zeros((1, D_UP), f32),
        "w_up": jax.random.normal(ks[13], (D, D_UP), f32) * 0.05,
        "b_up": jnp.zeros((1, D_UP), f32),
    }
    return p


def pack_params(p):
    """Fold/pack the raw parameters into the few contiguous slabs the fused
    kernel consumes (run once, outside jit).  All folds are exact linear
    algebra (up to float reassociation)."""
    f32 = jnp.float32
    scale = 1.0 / float(np.sqrt(D))

    # fold positional encoding into the k bias, merge k/v projections
    pos = _pe_encode(jnp.asarray(_PE_GRID), p["pe_gauss"])            # (S, D)
    w_kv = jnp.concatenate([p["wk"], p["wv"]], axis=1)                # (D, 2D)
    b_k = pos @ p["wk"] + p["bk"]                                     # (S, D)
    b_v = jnp.broadcast_to(p["bv"], (S, D))
    b_kv = jnp.concatenate([b_k, b_v], axis=1)                        # (S, 2D)
    wkvb = jnp.concatenate(
        [w_kv, b_kv, jnp.zeros((8 - S, 2 * D), f32)], axis=0)         # (72, 128)

    # fold the hyper-MLP output layer with w_up / b_up
    w_hu = p["w_hyper2"] @ p["w_up"].T                                # (D, D)
    b_hu = p["b_hyper2"] @ p["w_up"].T                                # (1, D)
    w_hb = (p["w_hyper2"] @ p["b_up"].T).T                            # (1, D)
    b_hb = (p["b_hyper2"] @ p["b_up"].T).reshape((1,))                # (1,)

    w64 = jnp.concatenate(
        [p["w_patch"], p["w_neck"], p["wq"] * scale,
         p["wo"], p["w_hyper1"], w_hu], axis=0)                       # (1088, D)

    bias_rows = jnp.concatenate(
        [p["b_patch"], p["b_neck"], p["bq"] * scale, p["bo"], p["b_hyper1"],
         b_hu, w_hb, p["w_mask"], p["b_mask"]], axis=0)               # (9, D)
    vec = jnp.concatenate(
        [bias_rows,
         jnp.zeros((16 - 9, D), f32),
         jnp.asarray(np.pad(_UP_SEL, ((0, 0), (0, D - IMG))), f32),
         jnp.asarray(np.pad(_DNH4, ((0, 0), (0, D - 8))), f32),
         jnp.zeros((4, D), f32),
         jnp.asarray(np.pad(_DNW4, ((0, 0), (0, D - 8))), f32),
         jnp.zeros((4, D), f32)], axis=0)                             # (40, D)

    scal = jnp.concatenate(
        [p["rough_w"], p["rough_b"], b_hb, jnp.zeros((3,), f32)])     # (8,)

    return {
        "scal": scal,
        "w64": w64,
        "wkvb": wkvb,
        "vec": vec,
        "cmat": jnp.asarray(_CMAT),
        "pe_gauss": p["pe_gauss"],
        "corner_embed": p["corner_embed"],
        "mask_token": p["mask_token"],
    }


if __name__ == "__main__":
    key = jax.random.PRNGKey(0)
    kp, ki = jax.random.split(key, 2)
    params = init_params(kp)
    packed = pack_params(params)

    image = jax.random.normal(ki, (2, C_IN, IMG, IMG), jnp.float32)
    box = jnp.array([[[4.0, 5.0, 20.0, 24.0]],
                     [[2.0, 3.0, 28.0, 30.0]]], jnp.float32)          # (B, 1, 4) xyxy

    fwd = jax.jit(glom_sam_forward)
    out = fwd(packed, image, box)
    jax.block_until_ready(out)

    assert out.shape == (2, 1, IMG, IMG), out.shape
    assert bool(jnp.all(jnp.isfinite(out)))
    print("KERNEL_OK")
</pallas_src>

<mosaic_0001>
module attributes {stable_mosaic.version = 11 : i64} {
  func.func @_glom_kernel(%arg0: i32, %arg1: memref<8xf32, #tpu.memory_space<smem>>, %arg2: memref<1x3x32x32xf32, #tpu.memory_space<vmem>>, %arg3: memref<1x4x768xf32, #tpu.memory_space<vmem>>, %arg4: memref<1x3x64xf32, #tpu.memory_space<vmem>>, %arg5: memref<1088x64xf32, #tpu.memory_space<vmem>>, %arg6: memref<72x128xf32, #tpu.memory_space<vmem>>, %arg7: memref<40x64xf32, #tpu.memory_space<vmem>>, %arg8: memref<32x128xf32, #tpu.memory_space<vmem>>, %arg9: memref<1x8x128xf32, #tpu.memory_space<vmem>>) attributes {dimension_semantics = [#tpu.dimension_semantics<parallel>], iteration_bounds = array<i64: 2>, scalar_prefetch = 0 : i64, scratch_operands = 0 : i64, tpu.core_type = #tpu.core_type<tc>, window_params = [{transform_indices = @transform_0, window_bounds = array<i64: 8>}, {transform_indices = @transform_1, window_bounds = array<i64: 1, 3, 32, 32>}, {transform_indices = @transform_2, window_bounds = array<i64: 1, 4, 768>}, {transform_indices = @transform_3, window_bounds = array<i64: 1, 3, 64>}, {pipeline_mode = #tpu.pipeline_mode<synchronous>, transform_indices = @transform_4, window_bounds = array<i64: 1088, 64>}, {pipeline_mode = #tpu.pipeline_mode<synchronous>, transform_indices = @transform_5, window_bounds = array<i64: 72, 128>}, {pipeline_mode = #tpu.pipeline_mode<synchronous>, transform_indices = @transform_6, window_bounds = array<i64: 40, 64>}, {pipeline_mode = #tpu.pipeline_mode<synchronous>, transform_indices = @transform_7, window_bounds = array<i64: 32, 128>}, {transform_indices = @transform_8, window_bounds = array<i64: 1, 8, 128>}]} {
    %c0 = arith.constant 0 : index
    %c0_0 = arith.constant 0 : index
    %0 = vector.load %arg7[%c0, %c0_0] : memref<40x64xf32, #tpu.memory_space<vmem>>, vector<40x64xf32>
    %1 = vector.extract_strided_slice %0 {offsets = [0, 0], sizes = [1, 64], strides = [1, 1]} : vector<40x64xf32> to vector<1x64xf32>
    %2 = vector.extract_strided_slice %0 {offsets = [1, 0], sizes = [1, 64], strides = [1, 1]} : vector<40x64xf32> to vector<1x64xf32>
    %3 = vector.extract_strided_slice %0 {offsets = [2, 0], sizes = [1, 64], strides = [1, 1]} : vector<40x64xf32> to vector<1x64xf32>
    %4 = vector.extract_strided_slice %0 {offsets = [3, 0], sizes = [1, 64], strides = [1, 1]} : vector<40x64xf32> to vector<1x64xf32>
    %5 = vector.extract_strided_slice %0 {offsets = [4, 0], sizes = [1, 64], strides = [1, 1]} : vector<40x64xf32> to vector<1x64xf32>
    %6 = vector.extract_strided_slice %0 {offsets = [5, 0], sizes = [1, 64], strides = [1, 1]} : vector<40x64xf32> to vector<1x64xf32>
    %7 = vector.extract_strided_slice %0 {offsets = [6, 0], sizes = [1, 64], strides = [1, 1]} : vector<40x64xf32> to vector<1x64xf32>
    %8 = vector.extract_strided_slice %0 {offsets = [7, 0], sizes = [1, 64], strides = [1, 1]} : vector<40x64xf32> to vector<1x64xf32>
    %9 = vector.extract_strided_slice %0 {offsets = [8, 0], sizes = [1, 64], strides = [1, 1]} : vector<40x64xf32> to vector<1x64xf32>
    %10 = vector.extract_strided_slice %0 {offsets = [16, 0], sizes = [8, 32], strides = [1, 1]} : vector<40x64xf32> to vector<8x32xf32>
    %11 = vector.extract_strided_slice %0 {offsets = [24, 0], sizes = [4, 8], strides = [1, 1]} : vector<40x64xf32> to vector<4x8xf32>
    %12 = vector.extract_strided_slice %0 {offsets = [32, 0], sizes = [4, 8], strides = [1, 1]} : vector<40x64xf32> to vector<4x8xf32>
    %c0_1 = arith.constant 0 : index
    %13 = memref.load %arg1[%c0_1] : memref<8xf32, #tpu.memory_space<smem>>
    %c0_2 = arith.constant 0 : index
    %c0_3 = arith.constant 0 : index
    %c0_4 = arith.constant 0 : index
    %c0_5 = arith.constant 0 : index
    %14 = vector.load %arg2[%c0_2, %c0_3, %c0_4, %c0_5] : memref<1x3x32x32xf32, #tpu.memory_space<vmem>>, vector<1x1x32x32xf32>
    %15 = vector.shape_cast %14 : vector<1x1x32x32xf32> to vector<32x32xf32>
    %16 = vector.broadcast %13 : f32 to vector<32x32xf32>
    %17 = arith.mulf %16, %15 : vector<32x32xf32>
    %c1 = arith.constant 1 : index
    %18 = memref.load %arg1[%c1] : memref<8xf32, #tpu.memory_space<smem>>
    %c0_6 = arith.constant 0 : index
    %c1_7 = arith.constant 1 : index
    %c0_8 = arith.constant 0 : index
    %c0_9 = arith.constant 0 : index
    %19 = vector.load %arg2[%c0_6, %c1_7, %c0_8, %c0_9] : memref<1x3x32x32xf32, #tpu.memory_space<vmem>>, vector<1x1x32x32xf32>
    %20 = vector.shape_cast %19 : vector<1x1x32x32xf32> to vector<32x32xf32>
    %21 = vector.broadcast %18 : f32 to vector<32x32xf32>
    %22 = arith.mulf %21, %20 : vector<32x32xf32>
    %23 = arith.addf %17, %22 : vector<32x32xf32>
    %c2 = arith.constant 2 : index
    %24 = memref.load %arg1[%c2] : memref<8xf32, #tpu.memory_space<smem>>
    %c0_10 = arith.constant 0 : index
    %c2_11 = arith.constant 2 : index
    %c0_12 = arith.constant 0 : index
    %c0_13 = arith.constant 0 : index
    %25 = vector.load %arg2[%c0_10, %c2_11, %c0_12, %c0_13] : memref<1x3x32x32xf32, #tpu.memory_space<vmem>>, vector<1x1x32x32xf32>
    %26 = vector.shape_cast %25 : vector<1x1x32x32xf32> to vector<32x32xf32>
    %27 = vector.broadcast %24 : f32 to vector<32x32xf32>
    %28 = arith.mulf %27, %26 : vector<32x32xf32>
    %29 = arith.addf %23, %28 : vector<32x32xf32>
    %c3 = arith.constant 3 : index
    %30 = memref.load %arg1[%c3] : memref<8xf32, #tpu.memory_space<smem>>
    %31 = vector.broadcast %30 : f32 to vector<32x32xf32>
    %32 = arith.addf %29, %31 : vector<32x32xf32>
    %cst = arith.constant dense<0.000000e+00> : vector<8x32xf32>
    %33 = tpu.matmul %10, %32, %cst {dimension_numbers = #tpu.dot_dimension_numbers<[1], [0], [0], [1], [0, 0, 1, 1], [], []>} : vector<8x32xf32>, vector<32x32xf32>, vector<8x32xf32> -> vector<8x32xf32>
    %cst_14 = arith.constant dense<0.000000e+00> : vector<8x8xf32>
    %34 = tpu.matmul %33, %10, %cst_14 {dimension_numbers = #tpu.dot_dimension_numbers<[1], [1], [0], [0], [0, 0, 1, 0], [], []>} : vector<8x32xf32>, vector<8x32xf32>, vector<8x8xf32> -> vector<8x8xf32>
    %35 = math.tanh %34 : vector<8x8xf32>
    %cst_15 = arith.constant dense<0.000000e+00> : vector<4x8xf32>
    %36 = tpu.matmul %11, %35, %cst_15 {dimension_numbers = #tpu.dot_dimension_numbers<[1], [0], [0], [1], [0, 0, 1, 1], [], []>} : vector<4x8xf32>, vector<8x8xf32>, vector<4x8xf32> -> vector<4x8xf32>
    %37 = arith.mulf %36, %12 : vector<4x8xf32>
    %cst_16 = arith.constant dense<0.000000e+00> : vector<4xf32>
    %38 = vector.multi_reduction <add>, %37, %cst_16 [1] : vector<4x8xf32> to vector<4xf32>
    %39 = vector.shape_cast %38 : vector<4xf32> to vector<4x1xf32>
    %40 = vector.broadcast %39 : vector<4x1xf32> to vector<4x64xf32>
    %41 = vector.broadcast %8 : vector<1x64xf32> to vector<4x64xf32>
    %42 = arith.mulf %40, %41 : vector<4x64xf32>
    %43 = vector.broadcast %9 : vector<1x64xf32> to vector<4x64xf32>
    %44 = arith.addf %42, %43 : vector<4x64xf32>
    %c0_17 = arith.constant 0 : index
    %c0_18 = arith.constant 0 : index
    %c0_19 = arith.constant 0 : index
    %45 = vector.load %arg3[%c0_17, %c0_18, %c0_19] : memref<1x4x768xf32, #tpu.memory_space<vmem>>, vector<1x4x768xf32>
    %46 = vector.shape_cast %45 : vector<1x4x768xf32> to vector<4x768xf32>
    %c0_20 = arith.constant 0 : index
    %c0_21 = arith.constant 0 : index
    %47 = vector.load %arg5[%c0_20, %c0_21] : memref<1088x64xf32, #tpu.memory_space<vmem>>, vector<768x64xf32>
    %cst_22 = arith.constant dense<0.000000e+00> : vector<4x64xf32>
    %48 = tpu.matmul %46, %47, %cst_22 {dimension_numbers = #tpu.dot_dimension_numbers<[1], [0], [0], [1], [0, 0, 1, 1], [], []>} : vector<4x768xf32>, vector<768x64xf32>, vector<4x64xf32> -> vector<4x64xf32>
    %49 = vector.broadcast %1 : vector<1x64xf32> to vector<4x64xf32>
    %50 = arith.addf %48, %49 : vector<4x64xf32>
    %cst_23 = arith.constant 0.000000e+00 : f32
    %51 = vector.broadcast %cst_23 : f32 to vector<4x64xf32>
    %52 = arith.maximumf %50, %51 : vector<4x64xf32>
    %c768 = arith.constant 768 : index
    %c0_24 = arith.constant 0 : index
    %53 = vector.load %arg5[%c768, %c0_24] : memref<1088x64xf32, #tpu.memory_space<vmem>>, vector<64x64xf32>
    %cst_25 = arith.constant dense<0.000000e+00> : vector<4x64xf32>
    %54 = tpu.matmul %52, %53, %cst_25 {dimension_numbers = #tpu.dot_dimension_numbers<[1], [0], [0], [1], [0, 0, 1, 1], [], []>} : vector<4x64xf32>, vector<64x64xf32>, vector<4x64xf32> -> vector<4x64xf32>
    %55 = vector.broadcast %2 : vector<1x64xf32> to vector<4x64xf32>
    %56 = arith.addf %54, %55 : vector<4x64xf32>
    %57 = arith.addf %56, %44 : vector<4x64xf32>
    %c0_26 = arith.constant 0 : index
    %c0_27 = arith.constant 0 : index
    %c0_28 = arith.constant 0 : index
    %58 = vector.load %arg4[%c0_26, %c0_27, %c0_28] : memref<1x3x64xf32, #tpu.memory_space<vmem>>, vector<1x3x64xf32>
    %59 = vector.shape_cast %58 : vector<1x3x64xf32> to vector<3x64xf32>
    %c832 = arith.constant 832 : index
    %c0_29 = arith.constant 0 : index
    %60 = vector.load %arg5[%c832, %c0_29] : memref<1088x64xf32, #tpu.memory_space<vmem>>, vector<64x64xf32>
    %cst_30 = arith.constant dense<0.000000e+00> : vector<3x64xf32>
    %61 = tpu.matmul %59, %60, %cst_30 {dimension_numbers = #tpu.dot_dimension_numbers<[1], [0], [0], [1], [0, 0, 1, 1], [], []>} : vector<3x64xf32>, vector<64x64xf32>, vector<3x64xf32> -> vector<3x64xf32>
    %62 = vector.broadcast %3 : vector<1x64xf32> to vector<3x64xf32>
    %63 = arith.addf %61, %62 : vector<3x64xf32>
    %c0_31 = arith.constant 0 : index
    %c0_32 = arith.constant 0 : index
    %64 = vector.load %arg6[%c0_31, %c0_32] : memref<72x128xf32, #tpu.memory_space<vmem>>, vector<64x128xf32>
    %cst_33 = arith.constant dense<0.000000e+00> : vector<4x128xf32>
    %65 = tpu.matmul %57, %64, %cst_33 {dimension_numbers = #tpu.dot_dimension_numbers<[1], [0], [0], [1], [0, 0, 1, 1], [], []>} : vector<4x64xf32>, vector<64x128xf32>, vector<4x128xf32> -> vector<4x128xf32>
    %c64 = arith.constant 64 : index
    %c0_34 = arith.constant 0 : index
    %66 = vector.load %arg6[%c64, %c0_34] : memref<72x128xf32, #tpu.memory_space<vmem>>, vector<4x128xf32>
    %67 = arith.addf %65, %66 : vector<4x128xf32>
    %68 = vector.extract_strided_slice %67 {offsets = [0, 0], sizes = [4, 64], strides = [1, 1]} : vector<4x128xf32> to vector<4x64xf32>
    %69 = vector.extract_strided_slice %67 {offsets = [0, 64], sizes = [4, 64], strides = [1, 1]} : vector<4x128xf32> to vector<4x64xf32>
    %cst_35 = arith.constant dense<0.000000e+00> : vector<3x4xf32>
    %70 = tpu.matmul %63, %68, %cst_35 {dimension_numbers = #tpu.dot_dimension_numbers<[1], [1], [0], [0], [0, 0, 1, 0], [], []>} : vector<3x64xf32>, vector<4x64xf32>, vector<3x4xf32> -> vector<3x4xf32>
    %cst_36 = arith.constant dense<0xFF800000> : vector<3xf32>
    %71 = vector.multi_reduction <maximumf>, %70, %cst_36 [1] : vector<3x4xf32> to vector<3xf32>
    %72 = vector.shape_cast %71 : vector<3xf32> to vector<3x1xf32>
    %73 = vector.broadcast %72 : vector<3x1xf32> to vector<3x4xf32>
    %74 = arith.subf %70, %73 : vector<3x4xf32>
    %75 = math.exp %74 : vector<3x4xf32>
    %cst_37 = arith.constant dense<0.000000e+00> : vector<3xf32>
    %76 = vector.multi_reduction <add>, %75, %cst_37 [1] : vector<3x4xf32> to vector<3xf32>
    %77 = vector.shape_cast %76 : vector<3xf32> to vector<3x1xf32>
    %78 = tpu.reciprocal %77 {approx = true} : vector<3x1xf32> -> vector<3x1xf32>
    %79 = vector.broadcast %78 : vector<3x1xf32> to vector<3x4xf32>
    %80 = arith.mulf %75, %79 : vector<3x4xf32>
    %cst_38 = arith.constant dense<0.000000e+00> : vector<3x64xf32>
    %81 = tpu.matmul %80, %69, %cst_38 {dimension_numbers = #tpu.dot_dimension_numbers<[1], [0], [0], [1], [0, 0, 1, 1], [], []>} : vector<3x4xf32>, vector<4x64xf32>, vector<3x64xf32> -> vector<3x64xf32>
    %c896 = arith.constant 896 : index
    %c0_39 = arith.constant 0 : index
    %82 = vector.load %arg5[%c896, %c0_39] : memref<1088x64xf32, #tpu.memory_space<vmem>>, vector<64x64xf32>
    %cst_40 = arith.constant dense<0.000000e+00> : vector<3x64xf32>
    %83 = tpu.matmul %81, %82, %cst_40 {dimension_numbers = #tpu.dot_dimension_numbers<[1], [0], [0], [1], [0, 0, 1, 1], [], []>} : vector<3x64xf32>, vector<64x64xf32>, vector<3x64xf32> -> vector<3x64xf32>
    %84 = arith.addf %59, %83 : vector<3x64xf32>
    %85 = vector.broadcast %4 : vector<1x64xf32> to vector<3x64xf32>
    %86 = arith.addf %84, %85 : vector<3x64xf32>
    %87 = vector.extract_strided_slice %86 {offsets = [0, 0], sizes = [1, 64], strides = [1, 1]} : vector<3x64xf32> to vector<1x64xf32>
    %c960 = arith.constant 960 : index
    %c0_41 = arith.constant 0 : index
    %88 = vector.load %arg5[%c960, %c0_41] : memref<1088x64xf32, #tpu.memory_space<vmem>>, vector<64x64xf32>
    %cst_42 = arith.constant dense<0.000000e+00> : vector<1x64xf32>
    %89 = tpu.matmul %87, %88, %cst_42 {dimension_numbers = #tpu.dot_dimension_numbers<[1], [0], [0], [1], [0, 0, 1, 1], [], []>} : vector<1x64xf32>, vector<64x64xf32>, vector<1x64xf32> -> vector<1x64xf32>
    %90 = arith.addf %89, %5 : vector<1x64xf32>
    %cst_43 = arith.constant 0.000000e+00 : f32
    %91 = vector.broadcast %cst_43 : f32 to vector<1x64xf32>
    %92 = arith.maximumf %90, %91 : vector<1x64xf32>
    %c1024 = arith.constant 1024 : index
    %c0_44 = arith.constant 0 : index
    %93 = vector.load %arg5[%c1024, %c0_44] : memref<1088x64xf32, #tpu.memory_space<vmem>>, vector<64x64xf32>
    %cst_45 = arith.constant dense<0.000000e+00> : vector<1x64xf32>
    %94 = tpu.matmul %92, %93, %cst_45 {dimension_numbers = #tpu.dot_dimension_numbers<[1], [0], [0], [1], [0, 0, 1, 1], [], []>} : vector<1x64xf32>, vector<64x64xf32>, vector<1x64xf32> -> vector<1x64xf32>
    %95 = arith.addf %94, %6 : vector<1x64xf32>
    %96 = arith.mulf %92, %7 : vector<1x64xf32>
    %cst_46 = arith.constant dense<0.000000e+00> : vector<1xf32>
    %97 = vector.multi_reduction <add>, %96, %cst_46 [1] : vector<1x64xf32> to vector<1xf32>
    %98 = vector.shape_cast %97 : vector<1xf32> to vector<1x1xf32>
    %c4 = arith.constant 4 : index
    %99 = memref.load %arg1[%c4] : memref<8xf32, #tpu.memory_space<smem>>
    %100 = vector.broadcast %99 : f32 to vector<1x1xf32>
    %101 = arith.addf %98, %100 : vector<1x1xf32>
    %cst_47 = arith.constant dense<0.000000e+00> : vector<1x4xf32>
    %102 = tpu.matmul %95, %57, %cst_47 {dimension_numbers = #tpu.dot_dimension_numbers<[1], [1], [0], [0], [0, 0, 1, 0], [], []>} : vector<1x64xf32>, vector<4x64xf32>, vector<1x4xf32> -> vector<1x4xf32>
    %c0_48 = arith.constant 0 : index
    %c0_49 = arith.constant 0 : index
    %103 = vector.load %arg8[%c0_48, %c0_49] : memref<32x128xf32, #tpu.memory_space<vmem>>, vector<32x128xf32>
    %104 = vector.extract_strided_slice %102 {offsets = [0, 0], sizes = [1, 1], strides = [1, 1]} : vector<1x4xf32> to vector<1x1xf32>
    %105 = vector.extract_strided_slice %103 {offsets = [0, 0], sizes = [8, 128], strides = [1, 1]} : vector<32x128xf32> to vector<8x128xf32>
    %106 = vector.broadcast %104 : vector<1x1xf32> to vector<8x128xf32>
    %107 = arith.mulf %106, %105 : vector<8x128xf32>
    %108 = vector.extract_strided_slice %102 {offsets = [0, 1], sizes = [1, 1], strides = [1, 1]} : vector<1x4xf32> to vector<1x1xf32>
    %109 = vector.extract_strided_slice %103 {offsets = [8, 0], sizes = [8, 128], strides = [1, 1]} : vector<32x128xf32> to vector<8x128xf32>
    %110 = vector.broadcast %108 : vector<1x1xf32> to vector<8x128xf32>
    %111 = arith.mulf %110, %109 : vector<8x128xf32>
    %112 = arith.addf %107, %111 : vector<8x128xf32>
    %113 = vector.extract_strided_slice %102 {offsets = [0, 2], sizes = [1, 1], strides = [1, 1]} : vector<1x4xf32> to vector<1x1xf32>
    %114 = vector.extract_strided_slice %103 {offsets = [16, 0], sizes = [8, 128], strides = [1, 1]} : vector<32x128xf32> to vector<8x128xf32>
    %115 = vector.broadcast %113 : vector<1x1xf32> to vector<8x128xf32>
    %116 = arith.mulf %115, %114 : vector<8x128xf32>
    %117 = arith.addf %112, %116 : vector<8x128xf32>
    %118 = vector.extract_strided_slice %102 {offsets = [0, 3], sizes = [1, 1], strides = [1, 1]} : vector<1x4xf32> to vector<1x1xf32>
    %119 = vector.extract_strided_slice %103 {offsets = [24, 0], sizes = [8, 128], strides = [1, 1]} : vector<32x128xf32> to vector<8x128xf32>
    %120 = vector.broadcast %118 : vector<1x1xf32> to vector<8x128xf32>
    %121 = arith.mulf %120, %119 : vector<8x128xf32>
    %122 = arith.addf %117, %121 : vector<8x128xf32>
    %123 = vector.broadcast %101 : vector<1x1xf32> to vector<8x128xf32>
    %124 = arith.addf %122, %123 : vector<8x128xf32>
    %c0_50 = arith.constant 0 : index
    %c0_51 = arith.constant 0 : index
    %c0_52 = arith.constant 0 : index
    %125 = vector.load %arg9[%c0_50, %c0_51, %c0_52] : memref<1x8x128xf32, #tpu.memory_space<vmem>>, vector<1x8x128xf32>
    %126 = vector.shape_cast %125 : vector<1x8x128xf32> to vector<8x128xf32>
    %127 = vector.shape_cast %124 : vector<8x128xf32> to vector<1x8x128xf32>
    tpu.vector_store %arg9[%c0_50, %c0_51, %c0_52], %127 {strides = array<i32>} : memref<1x8x128xf32, #tpu.memory_space<vmem>>, vector<1x8x128xf32>,
    return
  }
  func.func @transform_0(%arg0: i32) -> i32 {
    %c0_i32 = arith.constant 0 : i32
    %c0_i32_0 = arith.constant 0 : i32
    return %c0_i32 : i32
  }
  func.func @transform_1(%arg0: i32) -> (i32, i32, i32, i32) {
    %c0_i32 = arith.constant 0 : i32
    %c0_i32_0 = arith.constant 0 : i32
    %c0_i32_1 = arith.constant 0 : i32
    %c0_i32_2 = arith.constant 0 : i32
    return %arg0, %c0_i32, %c0_i32_0, %c0_i32_1 : i32, i32, i32, i32
  }
  func.func @transform_2(%arg0: i32) -> (i32, i32, i32) {
    %c0_i32 = arith.constant 0 : i32
    %c0_i32_0 = arith.constant 0 : i32
    %c0_i32_1 = arith.constant 0 : i32
    return %arg0, %c0_i32, %c0_i32_0 : i32, i32, i32
  }
  func.func @transform_3(%arg0: i32) -> (i32, i32, i32) {
    %c0_i32 = arith.constant 0 : i32
    %c0_i32_0 = arith.constant 0 : i32
    %c0_i32_1 = arith.constant 0 : i32
    return %arg0, %c0_i32, %c0_i32_0 : i32, i32, i32
  }
  func.func @transform_4(%arg0: i32) -> (i32, i32) {
    %c0_i32 = arith.constant 0 : i32
    %c0_i32_0 = arith.constant 0 : i32
    %c0_i32_1 = arith.constant 0 : i32
    return %c0_i32, %c0_i32_0 : i32, i32
  }
  func.func @transform_5(%arg0: i32) -> (i32, i32) {
    %c0_i32 = arith.constant 0 : i32
    %c0_i32_0 = arith.constant 0 : i32
    %c0_i32_1 = arith.constant 0 : i32
    return %c0_i32, %c0_i32_0 : i32, i32
  }
  func.func @transform_6(%arg0: i32) -> (i32, i32) {
    %c0_i32 = arith.constant 0 : i32
    %c0_i32_0 = arith.constant 0 : i32
    %c0_i32_1 = arith.constant 0 : i32
    return %c0_i32, %c0_i32_0 : i32, i32
  }
  func.func @transform_7(%arg0: i32) -> (i32, i32) {
    %c0_i32 = arith.constant 0 : i32
    %c0_i32_0 = arith.constant 0 : i32
    %c0_i32_1 = arith.constant 0 : i32
    return %c0_i32, %c0_i32_0 : i32, i32
  }
  func.func @transform_8(%arg0: i32) -> (i32, i32, i32) {
    %c0_i32 = arith.constant 0 : i32
    %c0_i32_0 = arith.constant 0 : i32
    %c0_i32_1 = arith.constant 0 : i32
    return %arg0, %c0_i32, %c0_i32_0 : i32, i32, i32
  }
}

</mosaic_0001>

<llo_original>
// kernel: glom_sam_forward.1
$region0: #{glom_sam_forward.1}
  #allocation0 [shape = 'u32[]', space=smem, size = 0x4, offset = 0x4, fixed_abs, tag = 'smem constant byte address 0x4 - core index']
  #allocation1 [shape = 'u32[144,128]{1,0:T(1,128)}', space=vmem, size = 0x12000, scoped, tag = 'internal scratch']
  %s0 = inlined_call_operand.vmem [shape: f32[8], index: 0, kind: input, shape index: {}]
  %s1 = inlined_call_operand.vmem [shape: f32[2,3,32,32], index: 1, kind: input, shape index: {}]
  %s2 = inlined_call_operand.vmem [shape: f32[2,4,768], index: 2, kind: input, shape index: {}]
  %s3 = inlined_call_operand.vmem [shape: f32[2,3,64], index: 3, kind: input, shape index: {}]
  %s4 = inlined_call_operand.vmem [shape: f32[1088,64], index: 4, kind: input, shape index: {}]
  %s5 = inlined_call_operand.vmem [shape: f32[72,128], index: 5, kind: input, shape index: {}]
  %s6 = inlined_call_operand.vmem [shape: f32[40,64], index: 6, kind: input, shape index: {}]
  %s7 = inlined_call_operand.vmem [shape: f32[32,128], index: 7, kind: input, shape index: {}]
  %s8 = inlined_call_operand.vmem [shape: f32[2,8,128], index: 8, kind: output, shape index: {}]
  %s9 = sld [smem:[#allocation0]]
  $region69: #{glom_sam_forward.1} parent=0
    _
  %s11 = ssub.s32 1, %s9
  %s12 = scalar_select 0, %s11, %s9
  $region1: #{glom_sam_forward.1} parent=0
    #allocation2 [shape = 'u8[512]{0}', space=smem, size = 0x200, scoped, tag = 'input window, operand 0, single buffered']
    #allocation3 [shape = 's32[2]{0}', space=sflag, size = 0x8, scoped, tag = 'scoped memory for glom_sam_forward.1']
    %13 = vsyncpa [#allocation3], 0
    loop: start=0, step=1, limit=4
    $region2: #{glom_sam_forward.1} parent=1 // loop_pre_header
      _
    $region3: #{glom_sam_forward.1} parent=1 // loop_header
      %s15 = sphi 0, %s19
      %p16 = scmp.ge.s32.totalorder %s15, 4
      %s23 = sphi 0, %s23
      %s25 = sphi 0, %s23
      %s26 = sphi 0, %s25
      %s40 = sphi 0, %s26
      %s46 = sphi 0, %s48
      %s49 = sphi 0, %s46
      %s50 = sphi 0, %s49
      %s66 = sphi 0, %s50
      %s72 = sphi 0, %s74
      %s75 = sphi 0, %s72
      %s76 = sphi 0, %s75
      %s92 = sphi 0, %s76
      %s98 = sphi 0, %s100
      %s101 = sphi 0, %s98
      %s102 = sphi 0, %s101
      %s118 = sphi 0, %s102
      %s122 = sphi 0, %s122
      %s124 = sphi 0, %s122
      %s125 = sphi 0, %s124
      %s139 = sphi 0, %s125
      %s143 = sphi 0, %s143
      %s145 = sphi 0, %s143
      %s146 = sphi 0, %s145
      %s160 = sphi 0, %s146
      %s164 = sphi 0, %s164
      %s166 = sphi 0, %s164
      %s167 = sphi 0, %s166
      %s181 = sphi 0, %s167
      %s185 = sphi 0, %s185
      %s187 = sphi 0, %s185
      %s188 = sphi 0, %s187
      %s202 = sphi 0, %s188
      %s208 = sphi 0, %s210
      %s211 = sphi 0, %s208
      %s212 = sphi 0, %s211
      %s228 = sphi 0, %s212
    $region4: #{glom_sam_forward.1} parent=1 // loop_header_branch
      %18 = sbr.rel (%p16) target = $region8
    $region5: #{glom_sam_forward.1} parent=1 // loop_body
      %s20 = ssub.s32 %s15, 1
      %s21 = ssub.s32 %s15, 2
      %s22 = sadd.s32 %s15, 1
      %s24 = sadd.s32 %s23, 1
      %p27 = scmp.eq.s32.totalorder %s15, 1
      %p28 = scmp.ne.s32.totalorder %s23, %s25
      %p29 = scmp.eq.s32.totalorder %s15, 0
      %p30 = por %p28, %p29
      %p31 = scmp.ne.s32.totalorder %s23, %s25
      %p32 = scmp.eq.s32.totalorder %s20, 1
      %p33 = por %p31, %p32
      %p34 = scmp.ne.s32.totalorder %s25, %s26
      %p35 = scmp.eq.s32.totalorder %s20, 0
      %p36 = por %p34, %p35
      %p37 = scmp.ne.s32.totalorder %s25, %s26
      %p38 = scmp.eq.s32.totalorder %s21, 1
      %p39 = por %p37, %p38
      %p41 = scmp.ne.s32.totalorder %s26, %s40
      %p42 = scmp.eq.s32.totalorder %s21, 0
      %p43 = por %p41, %p42
      %s44 = ssub.s32 %s15, %s22
      %p45 = scmp.eq.s32.totalorder %s44, 0
      %s47 = sadd.s32 %s46, 1
      %s48 = scalar_select %p45, %s46, %s47
      %p51 = pneg %p45
      %p52 = scmp.eq.s32.totalorder %s15, 1
      %p53 = por %p51, %p52
      %p54 = scmp.ne.s32.totalorder %s46, %s49
      %p55 = scmp.eq.s32.totalorder %s15, 0
      %p56 = por %p54, %p55
      %p57 = scmp.ne.s32.totalorder %s46, %s49
      %p58 = scmp.eq.s32.totalorder %s20, 1
      %p59 = por %p57, %p58
      %p60 = scmp.ne.s32.totalorder %s49, %s50
      %p61 = scmp.eq.s32.totalorder %s20, 0
      %p62 = por %p60, %p61
      %p63 = scmp.ne.s32.totalorder %s49, %s50
      %p64 = scmp.eq.s32.totalorder %s21, 1
      %p65 = por %p63, %p64
      %p67 = scmp.ne.s32.totalorder %s50, %s66
      %p68 = scmp.eq.s32.totalorder %s21, 0
      %p69 = por %p67, %p68
      %s70 = ssub.s32 %s15, %s22
      %p71 = scmp.eq.s32.totalorder %s70, 0
      %s73 = sadd.s32 %s72, 1
      %s74 = scalar_select %p71, %s72, %s73
      %p77 = pneg %p71
      %p78 = scmp.eq.s32.totalorder %s15, 1
      %p79 = por %p77, %p78
      %p80 = scmp.ne.s32.totalorder %s72, %s75
      %p81 = scmp.eq.s32.totalorder %s15, 0
      %p82 = por %p80, %p81
      %p83 = scmp.ne.s32.totalorder %s72, %s75
      %p84 = scmp.eq.s32.totalorder %s20, 1
      %p85 = por %p83, %p84
      %p86 = scmp.ne.s32.totalorder %s75, %s76
      %p87 = scmp.eq.s32.totalorder %s20, 0
      %p88 = por %p86, %p87
      %p89 = scmp.ne.s32.totalorder %s75, %s76
      %p90 = scmp.eq.s32.totalorder %s21, 1
      %p91 = por %p89, %p90
      %p93 = scmp.ne.s32.totalorder %s76, %s92
      %p94 = scmp.eq.s32.totalorder %s21, 0
      %p95 = por %p93, %p94
      %s96 = ssub.s32 %s15, %s22
      %p97 = scmp.eq.s32.totalorder %s96, 0
      %s99 = sadd.s32 %s98, 1
      %s100 = scalar_select %p97, %s98, %s99
      %p103 = pneg %p97
      %p104 = scmp.eq.s32.totalorder %s15, 1
      %p105 = por %p103, %p104
      %p106 = scmp.ne.s32.totalorder %s98, %s101
      %p107 = scmp.eq.s32.totalorder %s15, 0
      %p108 = por %p106, %p107
      %p109 = scmp.ne.s32.totalorder %s98, %s101
      %p110 = scmp.eq.s32.totalorder %s20, 1
      %p111 = por %p109, %p110
      %p112 = scmp.ne.s32.totalorder %s101, %s102
      %p113 = scmp.eq.s32.totalorder %s20, 0
      %p114 = por %p112, %p113
      %p115 = scmp.ne.s32.totalorder %s101, %s102
      %p116 = scmp.eq.s32.totalorder %s21, 1
      %p117 = por %p115, %p116
      %p119 = scmp.ne.s32.totalorder %s102, %s118
      %p120 = scmp.eq.s32.totalorder %s21, 0
      %p121 = por %p119, %p120
      %s123 = sadd.s32 %s122, 1
      %p126 = scmp.eq.s32.totalorder %s15, 1
      %p127 = scmp.ne.s32.totalorder %s122, %s124
      %p128 = scmp.eq.s32.totalorder %s15, 0
      %p129 = por %p127, %p128
      %p130 = scmp.ne.s32.totalorder %s122, %s124
      %p131 = scmp.eq.s32.totalorder %s20, 1
      %p132 = por %p130, %p131
      %p133 = scmp.ne.s32.totalorder %s124, %s125
      %p134 = scmp.eq.s32.totalorder %s20, 0
      %p135 = por %p133, %p134
      %p136 = scmp.ne.s32.totalorder %s124, %s125
      %p137 = scmp.eq.s32.totalorder %s21, 1
      %p138 = por %p136, %p137
      %p140 = scmp.ne.s32.totalorder %s125, %s139
      %p141 = scmp.eq.s32.totalorder %s21, 0
      %p142 = por %p140, %p141
      %s144 = sadd.s32 %s143, 1
      %p147 = scmp.eq.s32.totalorder %s15, 1
      %p148 = scmp.ne.s32.totalorder %s143, %s145
      %p149 = scmp.eq.s32.totalorder %s15, 0
      %p150 = por %p148, %p149
      %p151 = scmp.ne.s32.totalorder %s143, %s145
      %p152 = scmp.eq.s32.totalorder %s20, 1
      %p153 = por %p151, %p152
      %p154 = scmp.ne.s32.totalorder %s145, %s146
      %p155 = scmp.eq.s32.totalorder %s20, 0
      %p156 = por %p154, %p155
      %p157 = scmp.ne.s32.totalorder %s145, %s146
      %p158 = scmp.eq.s32.totalorder %s21, 1
      %p159 = por %p157, %p158
      %p161 = scmp.ne.s32.totalorder %s146, %s160
      %p162 = scmp.eq.s32.totalorder %s21, 0
      %p163 = por %p161, %p162
      %s165 = sadd.s32 %s164, 1
      %p168 = scmp.eq.s32.totalorder %s15, 1
      %p169 = scmp.ne.s32.totalorder %s164, %s166
      %p170 = scmp.eq.s32.totalorder %s15, 0
      %p171 = por %p169, %p170
      %p172 = scmp.ne.s32.totalorder %s164, %s166
      %p173 = scmp.eq.s32.totalorder %s20, 1
      %p174 = por %p172, %p173
      %p175 = scmp.ne.s32.totalorder %s166, %s167
      %p176 = scmp.eq.s32.totalorder %s20, 0
      %p177 = por %p175, %p176
      %p178 = scmp.ne.s32.totalorder %s166, %s167
      %p179 = scmp.eq.s32.totalorder %s21, 1
      %p180 = por %p178, %p179
      %p182 = scmp.ne.s32.totalorder %s167, %s181
      %p183 = scmp.eq.s32.totalorder %s21, 0
      %p184 = por %p182, %p183
      %s186 = sadd.s32 %s185, 1
      %p189 = scmp.eq.s32.totalorder %s15, 1
      %p190 = scmp.ne.s32.totalorder %s185, %s187
      %p191 = scmp.eq.s32.totalorder %s15, 0
      %p192 = por %p190, %p191
      %p193 = scmp.ne.s32.totalorder %s185, %s187
      %p194 = scmp.eq.s32.totalorder %s20, 1
      %p195 = por %p193, %p194
      %p196 = scmp.ne.s32.totalorder %s187, %s188
      %p197 = scmp.eq.s32.totalorder %s20, 0
      %p198 = por %p196, %p197
      %p199 = scmp.ne.s32.totalorder %s187, %s188
      %p200 = scmp.eq.s32.totalorder %s21, 1
      %p201 = por %p199, %p200
      %p203 = scmp.ne.s32.totalorder %s188, %s202
      %p204 = scmp.eq.s32.totalorder %s21, 0
      %p205 = por %p203, %p204
      %s206 = ssub.s32 %s15, %s22
      %p207 = scmp.eq.s32.totalorder %s206, 0
      %s209 = sadd.s32 %s208, 1
      %s210 = scalar_select %p207, %s208, %s209
      %p213 = pneg %p207
      %p214 = scmp.eq.s32.totalorder %s15, 1
      %p215 = por %p213, %p214
      %p216 = scmp.ne.s32.totalorder %s208, %s211
      %p217 = scmp.eq.s32.totalorder %s15, 0
      %p218 = por %p216, %p217
      %p219 = scmp.ne.s32.totalorder %s208, %s211
      %p220 = scmp.eq.s32.totalorder %s20, 1
      %p221 = por %p219, %p220
      %p222 = scmp.ne.s32.totalorder %s211, %s212
      %p223 = scmp.eq.s32.totalorder %s20, 0
      %p224 = por %p222, %p223
      %p225 = scmp.ne.s32.totalorder %s211, %s212
      %p226 = scmp.eq.s32.totalorder %s21, 1
      %p227 = por %p225, %p226
      %p229 = scmp.ne.s32.totalorder %s212, %s228
      %p230 = scmp.eq.s32.totalorder %s21, 0
      %p231 = por %p229, %p230
      %p232 = scmp.le.s32.totalorder 1, %s15
      %p233 = scmp.lt.s32.totalorder %s15, 3
      %p234 = pnand %p232, %p233
      %p235 = pneg %p234
      // Predicated region
      $region9: #{glom_sam_forward.1} parent=5 // pred_check
        _
      $region10: #{glom_sam_forward.1} parent=5 // pred_check_branch
        %237 = sbr.rel (%p234) target = $region12
      $region11: #{glom_sam_forward.1} parent=5 // pred_region
        %s238 = ssub.s32 %s15, 1
        // Predicated region
        $region13: #{glom_sam_forward.1} parent=11 // pred_check
          %p239 = pneg %p36
        $region14: #{glom_sam_forward.1} parent=11 // pred_check_branch
          %241 = sbr.rel (%p239) target = $region16
        $region15: #{glom_sam_forward.1} parent=11 // pred_region
          %s243 = ssub.s32 16, 16
          %244 = vsyncadd [#allocation3], %s243
          %s246 = sshll.u32 %s0, 4
          %s247 = int_to_ptr.vmem [resolvable:$true] %s246
          %249 = dma.vmem_to_smem %s247, 16, [#allocation2], [#allocation3]
        $region16: #{glom_sam_forward.1} parent=11 // pred_fallthru
          _
        // Predicated region
        $region17: #{glom_sam_forward.1} parent=11 // pred_check
          %p250 = pneg %p135
        $region18: #{glom_sam_forward.1} parent=11 // pred_check_branch
          %252 = sbr.rel (%p250) target = $region20
        $region19: #{glom_sam_forward.1} parent=11 // pred_region
          _
        $region20: #{glom_sam_forward.1} parent=11 // pred_fallthru
          _
        // Predicated region
        $region21: #{glom_sam_forward.1} parent=11 // pred_check
          %p253 = pneg %p156
        $region22: #{glom_sam_forward.1} parent=11 // pred_check_branch
          %255 = sbr.rel (%p253) target = $region24
        $region23: #{glom_sam_forward.1} parent=11 // pred_region
          _
        $region24: #{glom_sam_forward.1} parent=11 // pred_fallthru
          _
        // Predicated region
        $region25: #{glom_sam_forward.1} parent=11 // pred_check
          %p256 = pneg %p177
        $region26: #{glom_sam_forward.1} parent=11 // pred_check_branch
          %258 = sbr.rel (%p256) target = $region28
        $region27: #{glom_sam_forward.1} parent=11 // pred_region
          _
        $region28: #{glom_sam_forward.1} parent=11 // pred_fallthru
          _
        // Predicated region
        $region29: #{glom_sam_forward.1} parent=11 // pred_check
          %p259 = pneg %p198
        $region30: #{glom_sam_forward.1} parent=11 // pred_check_branch
          %261 = sbr.rel (%p259) target = $region32
        $region31: #{glom_sam_forward.1} parent=11 // pred_region
          _
        $region32: #{glom_sam_forward.1} parent=11 // pred_fallthru
          _
      $region12: #{glom_sam_forward.1} parent=5 // pred_fallthru
        _
      %p262 = scmp.lt.s32.totalorder %s15, 2
      // Predicated region
      $region33: #{glom_sam_forward.1} parent=5 // pred_check
        %p263 = pneg %p262
      $region34: #{glom_sam_forward.1} parent=5 // pred_check_branch
        %265 = sbr.rel (%p263) target = $region36
      $region35: #{glom_sam_forward.1} parent=5 // pred_region
        // Predicated region
        $region37: #{glom_sam_forward.1} parent=35 // pred_check
          %p266 = pneg %p56
        $region38: #{glom_sam_forward.1} parent=35 // pred_check_branch
          %268 = sbr.rel (%p266) target = $region40
        $region39: #{glom_sam_forward.1} parent=35 // pred_region
          %p269 = scmp.lt.s32.totalorder %s15, 1
          %s270 = scalar_select %p269, %s15, 1
          %s271 = smul.addr %s270, 12
          %s272 = smul.addr %s271, 8
          %s273 = scalar_lea.vmem %s1, %s272
        $region40: #{glom_sam_forward.1} parent=35 // pred_fallthru
          _
        // Predicated region
        $region41: #{glom_sam_forward.1} parent=35 // pred_check
          %p274 = pneg %p82
        $region42: #{glom_sam_forward.1} parent=35 // pred_check_branch
          %276 = sbr.rel (%p274) target = $region44
        $region43: #{glom_sam_forward.1} parent=35 // pred_region
          %p277 = scmp.lt.s32.totalorder %s15, 1
          %s278 = scalar_select %p277, %s15, 1
          %s279 = smul.addr %s278, 6
          %s280 = smul.addr %s279, 4
          %s281 = scalar_lea.vmem %s2, %s280
        $region44: #{glom_sam_forward.1} parent=35 // pred_fallthru
          _
        // Predicated region
        $region45: #{glom_sam_forward.1} parent=35 // pred_check
          %p282 = pneg %p108
        $region46: #{glom_sam_forward.1} parent=35 // pred_check_branch
          %284 = sbr.rel (%p282) target = $region48
        $region47: #{glom_sam_forward.1} parent=35 // pred_region
          %p285 = scmp.lt.s32.totalorder %s15, 1
          %s286 = scalar_select %p285, %s15, 1
          %s287 = smul.addr %s286, 4
          %s288 = scalar_lea.vmem %s3, %s287
        $region48: #{glom_sam_forward.1} parent=35 // pred_fallthru
          _
      $region36: #{glom_sam_forward.1} parent=5 // pred_fallthru
        _
      %p289 = scmp.le.s32.totalorder 1, %s15
      %p290 = scmp.lt.s32.totalorder %s15, 3
      %p291 = pnand %p289, %p290
      %p292 = pneg %p291
      // Predicated region
      $region49: #{glom_sam_forward.1} parent=5 // pred_check
        _
      $region50: #{glom_sam_forward.1} parent=5 // pred_check_branch
        %294 = sbr.rel (%p291) target = $region52
      $region51: #{glom_sam_forward.1} parent=5 // pred_region
        %s295 = ssub.s32 %s15, 1
        // Predicated region
        $region53: #{glom_sam_forward.1} parent=51 // pred_check
          %p296 = pneg %p36
        $region54: #{glom_sam_forward.1} parent=51 // pred_check_branch
          %298 = sbr.rel (%p296) target = $region56
        $region55: #{glom_sam_forward.1} parent=51 // pred_region
          %299 = dma.done [#allocation3], 16
        $region56: #{glom_sam_forward.1} parent=51 // pred_fallthru
          _
        %300 = sfence
        %p301 = pneg %p36
        %p302 = pneg %p33
        %p303 = scmp.lt.s32.totalorder %s20, 1
        %s304 = scalar_select %p303, %s20, 1
        %s305 = smul.addr %s304, 12
        %s306 = smul.addr %s305, 8
        %s307 = scalar_lea.vmem %s1, %s306
        %p308 = pneg %p62
        %p309 = pneg %p59
        %p310 = scmp.lt.s32.totalorder %s20, 1
        %s311 = scalar_select %p310, %s20, 1
        %s312 = smul.addr %s311, 6
        %s313 = smul.addr %s312, 4
        %s314 = scalar_lea.vmem %s2, %s313
        %p315 = pneg %p88
        %p316 = pneg %p85
        %p317 = scmp.lt.s32.totalorder %s20, 1
        %s318 = scalar_select %p317, %s20, 1
        %s319 = smul.addr %s318, 4
        %s320 = scalar_lea.vmem %s3, %s319
        %p321 = pneg %p114
        %p322 = pneg %p111
        %p323 = pneg %p135
        %p324 = pneg %p132
        %p325 = pneg %p156
        %p326 = pneg %p153
        %p327 = pneg %p177
        %p328 = pneg %p174
        %p329 = pneg %p198
        %p330 = pneg %p195
        %p331 = pneg %p224
        %p332 = pneg %p221
        %p333 = scmp.lt.s32.totalorder %s20, 1
        %s334 = scalar_select %p333, %s20, 1
        %s335 = smul.addr %s334, 8
        %s336 = scalar_lea.vmem %s8, %s335
        %p337 = scmp.lt.s32.totalorder %s20, 1
        %s338 = scalar_select %p337, %s20, 1
        %s339 = smul.addr %s338, 12
        %s340 = smul.addr %s339, 8
        %s341 = scalar_lea.vmem %s1, %s340
        %p342 = scmp.lt.s32.totalorder %s20, 1
        %s343 = scalar_select %p342, %s20, 1
        %s344 = smul.addr %s343, 6
        %s345 = smul.addr %s344, 4
        %s346 = scalar_lea.vmem %s2, %s345
        %p347 = scmp.lt.s32.totalorder %s20, 1
        %s348 = scalar_select %p347, %s20, 1
        %s349 = smul.addr %s348, 4
        %s350 = scalar_lea.vmem %s3, %s349
        %p351 = scmp.lt.s32.totalorder %s20, 1
        %s352 = scalar_select %p351, %s20, 1
        %s353 = smul.addr %s352, 8
        %s354 = scalar_lea.vmem %s8, %s353
        %v355 = vld [vmem:[%s6] sm:$0xff]
        %v356 = vld [vmem:[%s6 + $0x8] sm:$0xff]
        %v357 = vld [vmem:[%s6 + $0x10] sm:$0xff]
        %v358 = vld [vmem:[%s6 + $0x18] sm:$0xff]
        %v359 = vld [vmem:[%s6 + $0x20] sm:$0xff]
        %s360 = sld [smem:[#allocation2]]
        %v361 = vld [vmem:[%s341] sm:$0xff]
        %v362 = vld [vmem:[%s341 + $0x8] sm:$0xff]
        %v363 = vld [vmem:[%s341 + $0x10] sm:$0xff]
        %v364 = vld [vmem:[%s341 + $0x18] sm:$0xff]
        %v365 = vstv %s360
        %v366 = vmul.f32 %v365, %v361
        %v367 = vmul.f32 %v365, %v362
        %v368 = vmul.f32 %v365, %v363
        %v369 = vmul.f32 %v365, %v364
        %s370 = sld [smem:[#allocation2 + $0x1]]
        %s371 = scalar_lea.vmem %s341, 32
        %v372 = vld [vmem:[%s371] sm:$0xff]
        %v373 = vld [vmem:[%s371 + $0x8] sm:$0xff]
        %v374 = vld [vmem:[%s371 + $0x10] sm:$0xff]
        %v375 = vld [vmem:[%s371 + $0x18] sm:$0xff]
        %v376 = vstv %s370
        %v377 = vmul.f32 %v376, %v372
        %v378 = vmul.f32 %v376, %v373
        %v379 = vmul.f32 %v376, %v374
        %v380 = vmul.f32 %v376, %v375
        %v381 = vadd.f32 %v366, %v377
        %v382 = vadd.f32 %v367, %v378
        %v383 = vadd.f32 %v368, %v379
        %v384 = vadd.f32 %v369, %v380
        %s385 = sld [smem:[#allocation2 + $0x2]]
        %s386 = scalar_lea.vmem %s341, 64
        %v387 = vld [vmem:[%s386] sm:$0xff]
        %v388 = vld [vmem:[%s386 + $0x8] sm:$0xff]
        %v389 = vld [vmem:[%s386 + $0x10] sm:$0xff]
        %v390 = vld [vmem:[%s386 + $0x18] sm:$0xff]
        %v391 = vstv %s385
        %v392 = vmul.f32 %v391, %v387
        %v393 = vmul.f32 %v391, %v388
        %v394 = vmul.f32 %v391, %v389
        %v395 = vmul.f32 %v391, %v390
        %v396 = vadd.f32 %v381, %v392
        %v397 = vadd.f32 %v382, %v393
        %v398 = vadd.f32 %v383, %v394
        %v399 = vadd.f32 %v384, %v395
        %s400 = sld [smem:[#allocation2 + $0x3]]
        %v401 = vstv %s400
        %v402 = vadd.f32 %v396, %v401
        %v403 = vadd.f32 %v397, %v401
        %v404 = vadd.f32 %v398, %v401
        %v405 = vadd.f32 %v399, %v401
        %vm406 = vcmask 261120
        %v408 = vsel %vm406, %v357, 0
        %410 = vmatprep.subr.mxu0 0.0
        %411 = vmatpush1.msra.mxu0 0.0
        %412 = vmatprep.subr.mxu0 0.0
        %413 = vmatpush1.msra.mxu0 0.0
        %414 = vmatprep.subr.mxu0 0.0
        %415 = vmatpush1.msra.mxu0 0.0
        %416 = vmatprep.subr.mxu0 0.0
        %417 = vmatpush1.msra.mxu0 0.0
        %418 = vmatprep.subr.mxu0 0.0
        %419 = vmatpush1.msra.mxu0 0.0
        %420 = vmatprep.subr.mxu0 0.0
        %421 = vmatpush1.msra.mxu0 0.0
        %422 = vmatprep.subr.mxu0 0.0
        %423 = vmatpush1.msra.mxu0 0.0
        %424 = vmatprep.subr.mxu0 0.0
        %425 = vmatpush1.msra.mxu0 0.0
        %426 = vmatprep.subr.mxu0 0.0
        %427 = vmatpush1.msra.mxu0 0.0
        %428 = vmatprep.subr.mxu0 0.0
        %429 = vmatpush1.msra.mxu0 0.0
        %430 = vmatprep.subr.mxu0 0.0
        %431 = vmatpush1.msra.mxu0 0.0
        %432 = vmatprep.subr.mxu0 0.0
        %433 = vmatpush1.msra.mxu0 0.0
        %434 = vmatprep.subr.mxu0 0.0
        %435 = vmatpush1.msra.mxu0 %v405
        %436 = vmatprep.subr.mxu0 0.0
        %437 = vmatpush1.msra.mxu0 %v404
        %438 = vmatprep.subr.mxu0 0.0
        %439 = vmatpush1.msra.mxu0 %v403
        %440 = vmatprep.subr.mxu0 0.0
        %441 = vmatpush1.msra.mxu0 %v402
        %442 = vmatprep.subr.mxu0 0.0
        %443 = vmatpush2.msra.mxu0 0.0
        %444 = vmatprep.subr.mxu0 0.0
        %445 = vmatpush2.msra.mxu0 0.0
        %446 = vmatprep.subr.mxu0 0.0
        %447 = vmatpush2.msra.mxu0 0.0
        %448 = vmatprep.subr.mxu0 0.0
        %449 = vmatpush2.msra.mxu0 0.0
        %450 = vmatprep.subr.mxu0 0.0
        %451 = vmatpush2.msra.mxu0 0.0
        %452 = vmatprep.subr.mxu0 0.0
        %453 = vmatpush2.msra.mxu0 0.0
        %454 = vmatprep.subr.mxu0 0.0
        %455 = vmatpush2.msra.mxu0 0.0
        %456 = vmatprep.subr.mxu0 0.0
        %457 = vmatpush2.msra.mxu0 0.0
        %458 = vmatprep.subr.mxu0 0.0
        %459 = vmatpush2.msra.mxu0 0.0
        %460 = vmatprep.subr.mxu0 0.0
        %461 = vmatpush2.msra.mxu0 0.0
        %462 = vmatprep.subr.mxu0 0.0
        %463 = vmatpush2.msra.mxu0 0.0
        %464 = vmatprep.subr.mxu0 0.0
        %465 = vmatpush2.msra.mxu0 0.0
        %466 = vmatprep.subr.mxu0 0.0
        %467 = vmatpush2.msra.mxu0 0.0
        %468 = vmatprep.subr.mxu0 0.0
        %469 = vmatpush2.msra.mxu0 0.0
        %470 = vmatprep.subr.mxu0 0.0
        %471 = vmatpush2.msra.mxu0 0.0
        %472 = vmatprep.subr.mxu0 0.0
        %473 = vmatpush2.msra.mxu0 0.0
        %474 = vmatprep.mubr.f32.mxu0 0.0
        %475 = vmatmul.mubr.f32.gmra.mxu0 %v408
        %v476 = vpop.f32.mrf.mxu0
        %v477 = vadd.f32 0.0, %v476
        %v478 = vpop.f32.mrf.mxu0
        %479 = vdwg.mxu0
        %v481 = vsel %vm406, %v477, 0
        %483 = vmatprep.subr.mxu0 0.0
        %484 = vmatpush1.xpose.msra.mxu0 0.0
        %485 = vmatprep.subr.mxu0 0.0
        %486 = vmatpush1.xpose.msra.mxu0 0.0
        %487 = vmatprep.subr.mxu0 0.0
        %488 = vmatpush1.xpose.msra.mxu0 0.0
        %489 = vmatprep.subr.mxu0 0.0
        %490 = vmatpush1.xpose.msra.mxu0 0.0
        %491 = vmatprep.subr.mxu0 0.0
        %492 = vmatpush1.xpose.msra.mxu0 0.0
        %493 = vmatprep.subr.mxu0 0.0
        %494 = vmatpush1.xpose.msra.mxu0 0.0
        %495 = vmatprep.subr.mxu0 0.0
        %496 = vmatpush1.xpose.msra.mxu0 0.0
        %497 = vmatprep.subr.mxu0 0.0
        %498 = vmatpush1.xpose.msra.mxu0 0.0
        %499 = vmatprep.subr.mxu0 0.0
        %500 = vmatpush1.xpose.msra.mxu0 0.0
        %501 = vmatprep.subr.mxu0 0.0
        %502 = vmatpush1.xpose.msra.mxu0 0.0
        %503 = vmatprep.subr.mxu0 0.0
        %504 = vmatpush1.xpose.msra.mxu0 0.0
        %505 = vmatprep.subr.mxu0 0.0
        %506 = vmatpush1.xpose.msra.mxu0 0.0
        %507 = vmatprep.subr.mxu0 0.0
        %508 = vmatpush1.xpose.msra.mxu0 0.0
        %509 = vmatprep.subr.mxu0 0.0
        %510 = vmatpush1.xpose.msra.mxu0 0.0
        %511 = vmatprep.subr.mxu0 0.0
        %512 = vmatpush1.xpose.msra.mxu0 0.0
        %513 = vmatprep.subr.mxu0 0.0
        %514 = vmatpush1.xpose.msra.mxu0 %v408
        %515 = vmatprep.subr.mxu0 0.0
        %516 = vmatpush2.xpose.msra.mxu0 0.0
        %517 = vmatprep.subr.mxu0 0.0
        %518 = vmatpush2.xpose.msra.mxu0 0.0
        %519 = vmatprep.subr.mxu0 0.0
        %520 = vmatpush2.xpose.msra.mxu0 0.0
        %521 = vmatprep.subr.mxu0 0.0
        %522 = vmatpush2.xpose.msra.mxu0 0.0
        %523 = vmatprep.subr.mxu0 0.0
        %524 = vmatpush2.xpose.msra.mxu0 0.0
        %525 = vmatprep.subr.mxu0 0.0
        %526 = vmatpush2.xpose.msra.mxu0 0.0
        %527 = vmatprep.subr.mxu0 0.0
        %528 = vmatpush2.xpose.msra.mxu0 0.0
        %529 = vmatprep.subr.mxu0 0.0
        %530 = vmatpush2.xpose.msra.mxu0 0.0
        %531 = vmatprep.subr.mxu0 0.0
        %532 = vmatpush2.xpose.msra.mxu0 0.0
        %533 = vmatprep.subr.mxu0 0.0
        %534 = vmatpush2.xpose.msra.mxu0 0.0
        %535 = vmatprep.subr.mxu0 0.0
        %536 = vmatpush2.xpose.msra.mxu0 0.0
        %537 = vmatprep.subr.mxu0 0.0
        %538 = vmatpush2.xpose.msra.mxu0 0.0
        %539 = vmatprep.subr.mxu0 0.0
        %540 = vmatpush2.xpose.msra.mxu0 0.0
        %541 = vmatprep.subr.mxu0 0.0
        %542 = vmatpush2.xpose.msra.mxu0 0.0
        %543 = vmatprep.subr.mxu0 0.0
        %544 = vmatpush2.xpose.msra.mxu0 0.0
        %545 = vmatprep.subr.mxu0 0.0
        %546 = vmatpush2.xpose.msra.mxu0 0.0
        %547 = vmatprep.mubr.f32.mxu0 0.0
        %548 = vmatmul.mubr.f32.gmra.mxu0 %v481
        %v549 = vpop.f32.mrf.mxu0
        %v550 = vadd.f32 0.0, %v549
        %v551 = vpop.f32.mrf.mxu0
        %552 = vdwg.mxu0
        %v553 = vtanh.pop %v550
        %vm554 = vcmask 64512
        %v556 = vsel %vm554, %v358, 0
        %558 = vmatprep.subr.mxu0 0.0
        %559 = vmatpush1.msra.mxu0 0.0
        %560 = vmatprep.subr.mxu0 0.0
        %561 = vmatpush1.msra.mxu0 0.0
        %562 = vmatprep.subr.mxu0 0.0
        %563 = vmatpush1.msra.mxu0 0.0
        %564 = vmatprep.subr.mxu0 0.0
        %565 = vmatpush1.msra.mxu0 0.0
        %566 = vmatprep.subr.mxu0 0.0
        %567 = vmatpush1.msra.mxu0 0.0
        %568 = vmatprep.subr.mxu0 0.0
        %569 = vmatpush1.msra.mxu0 0.0
        %570 = vmatprep.subr.mxu0 0.0
        %571 = vmatpush1.msra.mxu0 0.0
        %572 = vmatprep.subr.mxu0 0.0
        %573 = vmatpush1.msra.mxu0 0.0
        %574 = vmatprep.subr.mxu0 0.0
        %575 = vmatpush1.msra.mxu0 0.0
        %576 = vmatprep.subr.mxu0 0.0
        %577 = vmatpush1.msra.mxu0 0.0
        %578 = vmatprep.subr.mxu0 0.0
        %579 = vmatpush1.msra.mxu0 0.0
        %580 = vmatprep.subr.mxu0 0.0
        %581 = vmatpush1.msra.mxu0 0.0
        %582 = vmatprep.subr.mxu0 0.0
        %583 = vmatpush1.msra.mxu0 0.0
        %584 = vmatprep.subr.mxu0 0.0
        %585 = vmatpush1.msra.mxu0 0.0
        %586 = vmatprep.subr.mxu0 0.0
        %587 = vmatpush1.msra.mxu0 0.0
        %588 = vmatprep.subr.mxu0 0.0
        %589 = vmatpush1.msra.mxu0 %v553
        %590 = vmatprep.subr.mxu0 0.0
        %591 = vmatpush2.msra.mxu0 0.0
        %592 = vmatprep.subr.mxu0 0.0
        %593 = vmatpush2.msra.mxu0 0.0
        %594 = vmatprep.subr.mxu0 0.0
        %595 = vmatpush2.msra.mxu0 0.0
        %596 = vmatprep.subr.mxu0 0.0
        %597 = vmatpush2.msra.mxu0 0.0
        %598 = vmatprep.subr.mxu0 0.0
        %599 = vmatpush2.msra.mxu0 0.0
        %600 = vmatprep.subr.mxu0 0.0
        %601 = vmatpush2.msra.mxu0 0.0
        %602 = vmatprep.subr.mxu0 0.0
        %603 = vmatpush2.msra.mxu0 0.0
        %604 = vmatprep.subr.mxu0 0.0
        %605 = vmatpush2.msra.mxu0 0.0
        %606 = vmatprep.subr.mxu0 0.0
        %607 = vmatpush2.msra.mxu0 0.0
        %608 = vmatprep.subr.mxu0 0.0
        %609 = vmatpush2.msra.mxu0 0.0
        %610 = vmatprep.subr.mxu0 0.0
        %611 = vmatpush2.msra.mxu0 0.0
        %612 = vmatprep.subr.mxu0 0.0
        %613 = vmatpush2.msra.mxu0 0.0
        %614 = vmatprep.subr.mxu0 0.0
        %615 = vmatpush2.msra.mxu0 0.0
        %616 = vmatprep.subr.mxu0 0.0
        %617 = vmatpush2.msra.mxu0 0.0
        %618 = vmatprep.subr.mxu0 0.0
        %619 = vmatpush2.msra.mxu0 0.0
        %620 = vmatprep.subr.mxu0 0.0
        %621 = vmatpush2.msra.mxu0 0.0
        %622 = vmatprep.mubr.f32.mxu0 0.0
        %623 = vmatmul.mubr.f32.gmra.mxu0 %v556
        %v624 = vpop.f32.mrf.mxu0
        %v625 = vadd.f32 0.0, %v624
        %v626 = vpop.f32.mrf.mxu0
        %627 = vdwg.mxu0
        %v628 = vmul.f32 %v625, %v359
        %vm629 = vcmask 60416
        %v630 = vsel %vm629, %v628, 0.0
        %631 = vadd.xlane.f32.xlu0 %v630
        %v632 = vpop.xlane.xlu0 %631
        %v633 = vlaneseq
        %v634 = vshrl.u32 %v633, 7
        %v635 = vsub.s32 7, %v634
        %v636 = vrot.slane %v355, %v635
        %v637 = vmul.f32 %v632, %v636
        %v638 = vlaneseq
        %v639 = vshrl.u32 %v638, 7
        %v640 = vsub.s32 0, %v639
        %v641 = vrot.slane %v356, %v640
        %v642 = vadd.f32 %v637, %v641
        %v643 = vld [vmem:[%s346] sm:$0xff]
        %v644 = vld [vmem:[%s346 + $0x8] sm:$0xff]
        %v645 = vld [vmem:[%s346 + $0x10] sm:$0xff]
        %v646 = vld [vmem:[%s4] sm:$0xff]
        %v647 = vld [vmem:[%s4 + $0x8] sm:$0xff]
        %v648 = vld [vmem:[%s4 + $0x10] sm:$0xff]
        %v649 = vld [vmem:[%s4 + $0x18] sm:$0xff]
        %v650 = vld [vmem:[%s4 + $0x20] sm:$0xff]
        %v651 = vld [vmem:[%s4 + $0x28] sm:$0xff]
        %v652 = vld [vmem:[%s4 + $0x30] sm:$0xff]
        %v653 = vld [vmem:[%s4 + $0x38] sm:$0xff]
        %v654 = vld [vmem:[%s4 + $0x40] sm:$0xff]
        %v655 = vld [vmem:[%s4 + $0x48] sm:$0xff]
        %v656 = vld [vmem:[%s4 + $0x50] sm:$0xff]
        %v657 = vld [vmem:[%s4 + $0x58] sm:$0xff]
        %v658 = vld [vmem:[%s4 + $0x60] sm:$0xff]
        %v659 = vld [vmem:[%s4 + $0x68] sm:$0xff]
        %v660 = vld [vmem:[%s4 + $0x70] sm:$0xff]
        %v661 = vld [vmem:[%s4 + $0x78] sm:$0xff]
        %v662 = vld [vmem:[%s4 + $0x80] sm:$0xff]
        %v663 = vld [vmem:[%s4 + $0x88] sm:$0xff]
        %v664 = vld [vmem:[%s4 + $0x90] sm:$0xff]
        %v665 = vld [vmem:[%s4 + $0x98] sm:$0xff]
        %v666 = vld [vmem:[%s4 + $0xa0] sm:$0xff]
        %v667 = vld [vmem:[%s4 + $0xa8] sm:$0xff]
        %v668 = vld [vmem:[%s4 + $0xb0] sm:$0xff]
        %v669 = vld [vmem:[%s4 + $0xb8] sm:$0xff]
        %v670 = vld [vmem:[%s4 + $0xc0] sm:$0xff]
        %v671 = vld [vmem:[%s4 + $0xc8] sm:$0xff]
        %v672 = vld [vmem:[%s4 + $0xd0] sm:$0xff]
        %v673 = vld [vmem:[%s4 + $0xd8] sm:$0xff]
        %v674 = vld [vmem:[%s4 + $0xe0] sm:$0xff]
        %v675 = vld [vmem:[%s4 + $0xe8] sm:$0xff]
        %v676 = vld [vmem:[%s4 + $0xf0] sm:$0xff]
        %v677 = vld [vmem:[%s4 + $0xf8] sm:$0xff]
        %v678 = vld [vmem:[%s4 + $0x100] sm:$0xff]
        %v679 = vld [vmem:[%s4 + $0x108] sm:$0xff]
        %v680 = vld [vmem:[%s4 + $0x110] sm:$0xff]
        %v681 = vld [vmem:[%s4 + $0x118] sm:$0xff]
        %v682 = vld [vmem:[%s4 + $0x120] sm:$0xff]
        %v683 = vld [vmem:[%s4 + $0x128] sm:$0xff]
        %v684 = vld [vmem:[%s4 + $0x130] sm:$0xff]
        %v685 = vld [vmem:[%s4 + $0x138] sm:$0xff]
        %v686 = vld [vmem:[%s4 + $0x140] sm:$0xff]
        %v687 = vld [vmem:[%s4 + $0x148] sm:$0xff]
        %v688 = vld [vmem:[%s4 + $0x150] sm:$0xff]
        %v689 = vld [vmem:[%s4 + $0x158] sm:$0xff]
        %v690 = vld [vmem:[%s4 + $0x160] sm:$0xff]
        %v691 = vld [vmem:[%s4 + $0x168] sm:$0xff]
        %v692 = vld [vmem:[%s4 + $0x170] sm:$0xff]
        %v693 = vld [vmem:[%s4 + $0x178] sm:$0xff]
        %v694 = vld [vmem:[%s4 + $0x180] sm:$0xff]
        %v695 = vld [vmem:[%s4 + $0x188] sm:$0xff]
        %v696 = vld [vmem:[%s4 + $0x190] sm:$0xff]
        %v697 = vld [vmem:[%s4 + $0x198] sm:$0xff]
        %v698 = vld [vmem:[%s4 + $0x1a0] sm:$0xff]
        %v699 = vld [vmem:[%s4 + $0x1a8] sm:$0xff]
        %v700 = vld [vmem:[%s4 + $0x1b0] sm:$0xff]
        %v701 = vld [vmem:[%s4 + $0x1b8] sm:$0xff]
        %v702 = vld [vmem:[%s4 + $0x1c0] sm:$0xff]
        %v703 = vld [vmem:[%s4 + $0x1c8] sm:$0xff]
        %v704 = vld [vmem:[%s4 + $0x1d0] sm:$0xff]
        %v705 = vld [vmem:[%s4 + $0x1d8] sm:$0xff]
        %v706 = vld [vmem:[%s4 + $0x1e0] sm:$0xff]
        %v707 = vld [vmem:[%s4 + $0x1e8] sm:$0xff]
        %v708 = vld [vmem:[%s4 + $0x1f0] sm:$0xff]
        %v709 = vld [vmem:[%s4 + $0x1f8] sm:$0xff]
        %v710 = vld [vmem:[%s4 + $0x200] sm:$0xff]
        %v711 = vld [vmem:[%s4 + $0x208] sm:$0xff]
        %v712 = vld [vmem:[%s4 + $0x210] sm:$0xff]
        %v713 = vld [vmem:[%s4 + $0x218] sm:$0xff]
        %v714 = vld [vmem:[%s4 + $0x220] sm:$0xff]
        %v715 = vld [vmem:[%s4 + $0x228] sm:$0xff]
        %v716 = vld [vmem:[%s4 + $0x230] sm:$0xff]
        %v717 = vld [vmem:[%s4 + $0x238] sm:$0xff]
        %v718 = vld [vmem:[%s4 + $0x240] sm:$0xff]
        %v719 = vld [vmem:[%s4 + $0x248] sm:$0xff]
        %v720 = vld [vmem:[%s4 + $0x250] sm:$0xff]
        %v721 = vld [vmem:[%s4 + $0x258] sm:$0xff]
        %v722 = vld [vmem:[%s4 + $0x260] sm:$0xff]
        %v723 = vld [vmem:[%s4 + $0x268] sm:$0xff]
        %v724 = vld [vmem:[%s4 + $0x270] sm:$0xff]
        %v725 = vld [vmem:[%s4 + $0x278] sm:$0xff]
        %v726 = vld [vmem:[%s4 + $0x280] sm:$0xff]
        %v727 = vld [vmem:[%s4 + $0x288] sm:$0xff]
        %v728 = vld [vmem:[%s4 + $0x290] sm:$0xff]
        %v729 = vld [vmem:[%s4 + $0x298] sm:$0xff]
        %v730 = vld [vmem:[%s4 + $0x2a0] sm:$0xff]
        %v731 = vld [vmem:[%s4 + $0x2a8] sm:$0xff]
        %v732 = vld [vmem:[%s4 + $0x2b0] sm:$0xff]
        %v733 = vld [vmem:[%s4 + $0x2b8] sm:$0xff]
        %v734 = vld [vmem:[%s4 + $0x2c0] sm:$0xff]
        %v735 = vld [vmem:[%s4 + $0x2c8] sm:$0xff]
        %v736 = vld [vmem:[%s4 + $0x2d0] sm:$0xff]
        %v737 = vld [vmem:[%s4 + $0x2d8] sm:$0xff]
        %v738 = vld [vmem:[%s4 + $0x2e0] sm:$0xff]
        %v739 = vld [vmem:[%s4 + $0x2e8] sm:$0xff]
        %v740 = vld [vmem:[%s4 + $0x2f0] sm:$0xff]
        %v741 = vld [vmem:[%s4 + $0x2f8] sm:$0xff]
        %v742 = vlaneseq
        %v743 = vshrl.u32 %v742, 7
        %v744 = vsub.s32 0, %v743
        %v745 = vrot.slane %v355, %v744
        %v749 = vcombine.high %v643, %v643
        %v750 = vcombine.high %v644, %v644
        %v751 = vcombine.high %v645, %v645
        %755 = vmatprep.subr.mxu0 0.0
        %756 = vmatpush1.msra.mxu0 %v661
        %757 = vmatprep.subr.mxu0 0.0
        %758 = vmatpush1.msra.mxu0 %v660
        %759 = vmatprep.subr.mxu0 0.0
        %760 = vmatpush1.msra.mxu0 %v659
        %761 = vmatprep.subr.mxu0 0.0
        %762 = vmatpush1.msra.mxu0 %v658
        %763 = vmatprep.subr.mxu0 0.0
        %764 = vmatpush1.msra.mxu0 %v657
        %765 = vmatprep.subr.mxu0 0.0
        %766 = vmatpush1.msra.mxu0 %v656
        %767 = vmatprep.subr.mxu0 0.0
        %768 = vmatpush1.msra.mxu0 %v655
        %769 = vmatprep.subr.mxu0 0.0
        %770 = vmatpush1.msra.mxu0 %v654
        %771 = vmatprep.subr.mxu0 0.0
        %772 = vmatpush1.msra.mxu0 %v653
        %773 = vmatprep.subr.mxu0 0.0
        %774 = vmatpush1.msra.mxu0 %v652
        %775 = vmatprep.subr.mxu0 0.0
        %776 = vmatpush1.msra.mxu0 %v651
        %777 = vmatprep.subr.mxu0 0.0
        %778 = vmatpush1.msra.mxu0 %v650
        %779 = vmatprep.subr.mxu0 0.0
        %780 = vmatpush1.msra.mxu0 %v649
        %781 = vmatprep.subr.mxu0 0.0
        %782 = vmatpush1.msra.mxu0 %v648
        %783 = vmatprep.subr.mxu0 0.0
        %784 = vmatpush1.msra.mxu0 %v647
        %785 = vmatprep.subr.mxu0 0.0
        %786 = vmatpush1.msra.mxu0 %v646
        %787 = vmatprep.subr.mxu0 0.0
        %788 = vmatpush2.msra.mxu0 %v677
        %789 = vmatprep.subr.mxu0 0.0
        %790 = vmatpush2.msra.mxu0 %v676
        %791 = vmatprep.subr.mxu0 0.0
        %792 = vmatpush2.msra.mxu0 %v675
        %793 = vmatprep.subr.mxu0 0.0
        %794 = vmatpush2.msra.mxu0 %v674
        %795 = vmatprep.subr.mxu0 0.0
        %796 = vmatpush2.msra.mxu0 %v673
        %797 = vmatprep.subr.mxu0 0.0
        %798 = vmatpush2.msra.mxu0 %v672
        %799 = vmatprep.subr.mxu0 0.0
        %800 = vmatpush2.msra.mxu0 %v671
        %801 = vmatprep.subr.mxu0 0.0
        %802 = vmatpush2.msra.mxu0 %v670
        %803 = vmatprep.subr.mxu0 0.0
        %804 = vmatpush2.msra.mxu0 %v669
        %805 = vmatprep.subr.mxu0 0.0
        %806 = vmatpush2.msra.mxu0 %v668
        %807 = vmatprep.subr.mxu0 0.0
        %808 = vmatpush2.msra.mxu0 %v667
        %809 = vmatprep.subr.mxu0 0.0
        %810 = vmatpush2.msra.mxu0 %v666
        %811 = vmatprep.subr.mxu0 0.0
        %812 = vmatpush2.msra.mxu0 %v665
        %813 = vmatprep.subr.mxu0 0.0
        %814 = vmatpush2.msra.mxu0 %v664
        %815 = vmatprep.subr.mxu0 0.0
        %816 = vmatpush2.msra.mxu0 %v663
        %817 = vmatprep.subr.mxu0 0.0
        %818 = vmatpush2.msra.mxu0 %v662
        %819 = vmatprep.mubr.f32.mxu0 %v749
        %820 = vmatmul.mubr.f32.gmra.mxu0 %v643
        %v821 = vpop.f32.mrf.mxu0
        %v822 = vadd.f32 %v745, %v821
        %v823 = vpop.f32.mrf.mxu0
        %824 = vdwg.mxu0
        %825 = vmatprep.subr.mxu0 0.0
        %826 = vmatpush1.msra.mxu0 %v693
        %827 = vmatprep.subr.mxu0 0.0
        %828 = vmatpush1.msra.mxu0 %v692
        %829 = vmatprep.subr.mxu0 0.0
        %830 = vmatpush1.msra.mxu0 %v691
        %831 = vmatprep.subr.mxu0 0.0
        %832 = vmatpush1.msra.mxu0 %v690
        %833 = vmatprep.subr.mxu0 0.0
        %834 = vmatpush1.msra.mxu0 %v689
        %835 = vmatprep.subr.mxu0 0.0
        %836 = vmatpush1.msra.mxu0 %v688
        %837 = vmatprep.subr.mxu0 0.0
        %838 = vmatpush1.msra.mxu0 %v687
        %839 = vmatprep.subr.mxu0 0.0
        %840 = vmatpush1.msra.mxu0 %v686
        %841 = vmatprep.subr.mxu0 0.0
        %842 = vmatpush1.msra.mxu0 %v685
        %843 = vmatprep.subr.mxu0 0.0
        %844 = vmatpush1.msra.mxu0 %v684
        %845 = vmatprep.subr.mxu0 0.0
        %846 = vmatpush1.msra.mxu0 %v683
        %847 = vmatprep.subr.mxu0 0.0
        %848 = vmatpush1.msra.mxu0 %v682
        %849 = vmatprep.subr.mxu0 0.0
        %850 = vmatpush1.msra.mxu0 %v681
        %851 = vmatprep.subr.mxu0 0.0
        %852 = vmatpush1.msra.mxu0 %v680
        %853 = vmatprep.subr.mxu0 0.0
        %854 = vmatpush1.msra.mxu0 %v679
        %855 = vmatprep.subr.mxu0 0.0
        %856 = vmatpush1.msra.mxu0 %v678
        %857 = vmatprep.subr.mxu0 0.0
        %858 = vmatpush2.msra.mxu0 %v709
        %859 = vmatprep.subr.mxu0 0.0
        %860 = vmatpush2.msra.mxu0 %v708
        %861 = vmatprep.subr.mxu0 0.0
        %862 = vmatpush2.msra.mxu0 %v707
        %863 = vmatprep.subr.mxu0 0.0
        %864 = vmatpush2.msra.mxu0 %v706
        %865 = vmatprep.subr.mxu0 0.0
        %866 = vmatpush2.msra.mxu0 %v705
        %867 = vmatprep.subr.mxu0 0.0
        %868 = vmatpush2.msra.mxu0 %v704
        %869 = vmatprep.subr.mxu0 0.0
        %870 = vmatpush2.msra.mxu0 %v703
        %871 = vmatprep.subr.mxu0 0.0
        %872 = vmatpush2.msra.mxu0 %v702
        %873 = vmatprep.subr.mxu0 0.0
        %874 = vmatpush2.msra.mxu0 %v701
        %875 = vmatprep.subr.mxu0 0.0
        %876 = vmatpush2.msra.mxu0 %v700
        %877 = vmatprep.subr.mxu0 0.0
        %878 = vmatpush2.msra.mxu0 %v699
        %879 = vmatprep.subr.mxu0 0.0
        %880 = vmatpush2.msra.mxu0 %v698
        %881 = vmatprep.subr.mxu0 0.0
        %882 = vmatpush2.msra.mxu0 %v697
        %883 = vmatprep.subr.mxu0 0.0
        %884 = vmatpush2.msra.mxu0 %v696
        %885 = vmatprep.subr.mxu0 0.0
        %886 = vmatpush2.msra.mxu0 %v695
        %887 = vmatprep.subr.mxu0 0.0
        %888 = vmatpush2.msra.mxu0 %v694
        %889 = vmatprep.mubr.f32.mxu0 %v750
        %890 = vmatmul.mubr.f32.gmra.mxu0 %v644
        %v891 = vpop.f32.mrf.mxu0
        %v892 = vadd.f32 %v822, %v891
        %v893 = vpop.f32.mrf.mxu0
        %894 = vdwg.mxu0
        %895 = vmatprep.subr.mxu0 0.0
        %896 = vmatpush1.msra.mxu0 %v725
        %897 = vmatprep.subr.mxu0 0.0
        %898 = vmatpush1.msra.mxu0 %v724
        %899 = vmatprep.subr.mxu0 0.0
        %900 = vmatpush1.msra.mxu0 %v723
        %901 = vmatprep.subr.mxu0 0.0
        %902 = vmatpush1.msra.mxu0 %v722
        %903 = vmatprep.subr.mxu0 0.0
        %904 = vmatpush1.msra.mxu0 %v721
        %905 = vmatprep.subr.mxu0 0.0
        %906 = vmatpush1.msra.mxu0 %v720
        %907 = vmatprep.subr.mxu0 0.0
        %908 = vmatpush1.msra.mxu0 %v719
        %909 = vmatprep.subr.mxu0 0.0
        %910 = vmatpush1.msra.mxu0 %v718
        %911 = vmatprep.subr.mxu0 0.0
        %912 = vmatpush1.msra.mxu0 %v717
        %913 = vmatprep.subr.mxu0 0.0
        %914 = vmatpush1.msra.mxu0 %v716
        %915 = vmatprep.subr.mxu0 0.0
        %916 = vmatpush1.msra.mxu0 %v715
        %917 = vmatprep.subr.mxu0 0.0
        %918 = vmatpush1.msra.mxu0 %v714
        %919 = vmatprep.subr.mxu0 0.0
        %920 = vmatpush1.msra.mxu0 %v713
        %921 = vmatprep.subr.mxu0 0.0
        %922 = vmatpush1.msra.mxu0 %v712
        %923 = vmatprep.subr.mxu0 0.0
        %924 = vmatpush1.msra.mxu0 %v711
        %925 = vmatprep.subr.mxu0 0.0
        %926 = vmatpush1.msra.mxu0 %v710
        %927 = vmatprep.subr.mxu0 0.0
        %928 = vmatpush2.msra.mxu0 %v741
        %929 = vmatprep.subr.mxu0 0.0
        %930 = vmatpush2.msra.mxu0 %v740
        %931 = vmatprep.subr.mxu0 0.0
        %932 = vmatpush2.msra.mxu0 %v739
        %933 = vmatprep.subr.mxu0 0.0
        %934 = vmatpush2.msra.mxu0 %v738
        %935 = vmatprep.subr.mxu0 0.0
        %936 = vmatpush2.msra.mxu0 %v737
        %937 = vmatprep.subr.mxu0 0.0
        %938 = vmatpush2.msra.mxu0 %v736
        %939 = vmatprep.subr.mxu0 0.0
        %940 = vmatpush2.msra.mxu0 %v735
        %941 = vmatprep.subr.mxu0 0.0
        %942 = vmatpush2.msra.mxu0 %v734
        %943 = vmatprep.subr.mxu0 0.0
        %944 = vmatpush2.msra.mxu0 %v733
        %945 = vmatprep.subr.mxu0 0.0
        %946 = vmatpush2.msra.mxu0 %v732
        %947 = vmatprep.subr.mxu0 0.0
        %948 = vmatpush2.msra.mxu0 %v731
        %949 = vmatprep.subr.mxu0 0.0
        %950 = vmatpush2.msra.mxu0 %v730
        %951 = vmatprep.subr.mxu0 0.0
        %952 = vmatpush2.msra.mxu0 %v729
        %953 = vmatprep.subr.mxu0 0.0
        %954 = vmatpush2.msra.mxu0 %v728
        %955 = vmatprep.subr.mxu0 0.0
        %956 = vmatpush2.msra.mxu0 %v727
        %957 = vmatprep.subr.mxu0 0.0
        %958 = vmatpush2.msra.mxu0 %v726
        %959 = vmatprep.mubr.f32.mxu0 %v751
        %960 = vmatmul.mubr.f32.gmra.mxu0 %v645
        %v961 = vpop.f32.mrf.mxu0
        %v962 = vadd.f32 %v892, %v961
        %v963 = vpop.f32.mrf.mxu0
        %964 = vdwg.mxu0
        %v965 = vmax.f32 %v962, 0.0
        %v966 = vld [vmem:[%s4 + $0x300] sm:$0xff]
        %v967 = vld [vmem:[%s4 + $0x308] sm:$0xff]
        %v968 = vld [vmem:[%s4 + $0x310] sm:$0xff]
        %v969 = vld [vmem:[%s4 + $0x318] sm:$0xff]
        %v970 = vld [vmem:[%s4 + $0x320] sm:$0xff]
        %v971 = vld [vmem:[%s4 + $0x328] sm:$0xff]
        %v972 = vld [vmem:[%s4 + $0x330] sm:$0xff]
        %v973 = vld [vmem:[%s4 + $0x338] sm:$0xff]
        %v974 = vlaneseq
        %v975 = vshrl.u32 %v974, 7
        %v976 = vsub.s32 1, %v975
        %v977 = vrot.slane %v355, %v976
        %vm978 = vcmask 523264
        %v980 = vsel %vm978, %v965, 0
        %982 = vmatprep.subr.mxu0 0.0
        %983 = vmatpush1.msra.mxu0 0.0
        %984 = vmatprep.subr.mxu0 0.0
        %985 = vmatpush1.msra.mxu0 0.0
        %986 = vmatprep.subr.mxu0 0.0
        %987 = vmatpush1.msra.mxu0 0.0
        %988 = vmatprep.subr.mxu0 0.0
        %989 = vmatpush1.msra.mxu0 0.0
        %990 = vmatprep.subr.mxu0 0.0
        %991 = vmatpush1.msra.mxu0 0.0
        %992 = vmatprep.subr.mxu0 0.0
        %993 = vmatpush1.msra.mxu0 0.0
        %994 = vmatprep.subr.mxu0 0.0
        %995 = vmatpush1.msra.mxu0 0.0
        %996 = vmatprep.subr.mxu0 0.0
        %997 = vmatpush1.msra.mxu0 0.0
        %998 = vmatprep.subr.mxu0 0.0
        %999 = vmatpush1.msra.mxu0 %v973
        %1000 = vmatprep.subr.mxu0 0.0
        %1001 = vmatpush1.msra.mxu0 %v972
        %1002 = vmatprep.subr.mxu0 0.0
        %1003 = vmatpush1.msra.mxu0 %v971
        %1004 = vmatprep.subr.mxu0 0.0
        %1005 = vmatpush1.msra.mxu0 %v970
        %1006 = vmatprep.subr.mxu0 0.0
        %1007 = vmatpush1.msra.mxu0 %v969
        %1008 = vmatprep.subr.mxu0 0.0
        %1009 = vmatpush1.msra.mxu0 %v968
        %1010 = vmatprep.subr.mxu0 0.0
        %1011 = vmatpush1.msra.mxu0 %v967
        %1012 = vmatprep.subr.mxu0 0.0
        %1013 = vmatpush1.msra.mxu0 %v966
        %1014 = vmatprep.subr.mxu0 0.0
        %1015 = vmatpush2.msra.mxu0 0.0
        %1016 = vmatprep.subr.mxu0 0.0
        %1017 = vmatpush2.msra.mxu0 0.0
        %1018 = vmatprep.subr.mxu0 0.0
        %1019 = vmatpush2.msra.mxu0 0.0
        %1020 = vmatprep.subr.mxu0 0.0
        %1021 = vmatpush2.msra.mxu0 0.0
        %1022 = vmatprep.subr.mxu0 0.0
        %1023 = vmatpush2.msra.mxu0 0.0
        %1024 = vmatprep.subr.mxu0 0.0
        %1025 = vmatpush2.msra.mxu0 0.0
        %1026 = vmatprep.subr.mxu0 0.0
        %1027 = vmatpush2.msra.mxu0 0.0
        %1028 = vmatprep.subr.mxu0 0.0
        %1029 = vmatpush2.msra.mxu0 0.0
        %1030 = vmatprep.subr.mxu0 0.0
        %1031 = vmatpush2.msra.mxu0 0.0
        %1032 = vmatprep.subr.mxu0 0.0
        %1033 = vmatpush2.msra.mxu0 0.0
        %1034 = vmatprep.subr.mxu0 0.0
        %1035 = vmatpush2.msra.mxu0 0.0
        %1036 = vmatprep.subr.mxu0 0.0
        %1037 = vmatpush2.msra.mxu0 0.0
        %1038 = vmatprep.subr.mxu0 0.0
        %1039 = vmatpush2.msra.mxu0 0.0
        %1040 = vmatprep.subr.mxu0 0.0
        %1041 = vmatpush2.msra.mxu0 0.0
        %1042 = vmatprep.subr.mxu0 0.0
        %1043 = vmatpush2.msra.mxu0 0.0
        %1044 = vmatprep.subr.mxu0 0.0
        %1045 = vmatpush2.msra.mxu0 0.0
        %1046 = vmatprep.mubr.f32.mxu0 0.0
        %1047 = vmatmul.mubr.f32.gmra.mxu0 %v980
        %v1048 = vpop.f32.mrf.mxu0
        %v1049 = vadd.f32 %v977, %v1048
        %v1050 = vpop.f32.mrf.mxu0
        %1051 = vdwg.mxu0
        %v1052 = vadd.f32 %v1049, %v642
        %v1053 = vld [vmem:[%s350] sm:$0x7]
        %v1054 = vld [vmem:[%s4 + $0x340] sm:$0xff]
        %v1055 = vld [vmem:[%s4 + $0x348] sm:$0xff]
        %v1056 = vld [vmem:[%s4 + $0x350] sm:$0xff]
        %v1057 = vld [vmem:[%s4 + $0x358] sm:$0xff]
        %v1058 = vld [vmem:[%s4 + $0x360] sm:$0xff]
        %v1059 = vld [vmem:[%s4 + $0x368] sm:$0xff]
        %v1060 = vld [vmem:[%s4 + $0x370] sm:$0xff]
        %v1061 = vld [vmem:[%s4 + $0x378] sm:$0xff]
        %v1062 = vlaneseq
        %v1063 = vshrl.u32 %v1062, 7
        %v1064 = vsub.s32 2, %v1063
        %v1065 = vrot.slane %v355, %v1064
        %v1067 = vsel %vm978, %v1053, 0
        %1069 = vmatprep.subr.mxu0 0.0
        %1070 = vmatpush1.msra.mxu0 0.0
        %1071 = vmatprep.subr.mxu0 0.0
        %1072 = vmatpush1.msra.mxu0 0.0
        %1073 = vmatprep.subr.mxu0 0.0
        %1074 = vmatpush1.msra.mxu0 0.0
        %1075 = vmatprep.subr.mxu0 0.0
        %1076 = vmatpush1.msra.mxu0 0.0
        %1077 = vmatprep.subr.mxu0 0.0
        %1078 = vmatpush1.msra.mxu0 0.0
        %1079 = vmatprep.subr.mxu0 0.0
        %1080 = vmatpush1.msra.mxu0 0.0
        %1081 = vmatprep.subr.mxu0 0.0
        %1082 = vmatpush1.msra.mxu0 0.0
        %1083 = vmatprep.subr.mxu0 0.0
        %1084 = vmatpush1.msra.mxu0 0.0
        %1085 = vmatprep.subr.mxu0 0.0
        %1086 = vmatpush1.msra.mxu0 %v1061
        %1087 = vmatprep.subr.mxu0 0.0
        %1088 = vmatpush1.msra.mxu0 %v1060
        %1089 = vmatprep.subr.mxu0 0.0
        %1090 = vmatpush1.msra.mxu0 %v1059
        %1091 = vmatprep.subr.mxu0 0.0
        %1092 = vmatpush1.msra.mxu0 %v1058
        %1093 = vmatprep.subr.mxu0 0.0
        %1094 = vmatpush1.msra.mxu0 %v1057
        %1095 = vmatprep.subr.mxu0 0.0
        %1096 = vmatpush1.msra.mxu0 %v1056
        %1097 = vmatprep.subr.mxu0 0.0
        %1098 = vmatpush1.msra.mxu0 %v1055
        %1099 = vmatprep.subr.mxu0 0.0
        %1100 = vmatpush1.msra.mxu0 %v1054
        %1101 = vmatprep.subr.mxu0 0.0
        %1102 = vmatpush2.msra.mxu0 0.0
        %1103 = vmatprep.subr.mxu0 0.0
        %1104 = vmatpush2.msra.mxu0 0.0
        %1105 = vmatprep.subr.mxu0 0.0
        %1106 = vmatpush2.msra.mxu0 0.0
        %1107 = vmatprep.subr.mxu0 0.0
        %1108 = vmatpush2.msra.mxu0 0.0
        %1109 = vmatprep.subr.mxu0 0.0
        %1110 = vmatpush2.msra.mxu0 0.0
        %1111 = vmatprep.subr.mxu0 0.0
        %1112 = vmatpush2.msra.mxu0 0.0
        %1113 = vmatprep.subr.mxu0 0.0
        %1114 = vmatpush2.msra.mxu0 0.0
        %1115 = vmatprep.subr.mxu0 0.0
        %1116 = vmatpush2.msra.mxu0 0.0
        %1117 = vmatprep.subr.mxu0 0.0
        %1118 = vmatpush2.msra.mxu0 0.0
        %1119 = vmatprep.subr.mxu0 0.0
        %1120 = vmatpush2.msra.mxu0 0.0
        %1121 = vmatprep.subr.mxu0 0.0
        %1122 = vmatpush2.msra.mxu0 0.0
        %1123 = vmatprep.subr.mxu0 0.0
        %1124 = vmatpush2.msra.mxu0 0.0
        %1125 = vmatprep.subr.mxu0 0.0
        %1126 = vmatpush2.msra.mxu0 0.0
        %1127 = vmatprep.subr.mxu0 0.0
        %1128 = vmatpush2.msra.mxu0 0.0
        %1129 = vmatprep.subr.mxu0 0.0
        %1130 = vmatpush2.msra.mxu0 0.0
        %1131 = vmatprep.subr.mxu0 0.0
        %1132 = vmatpush2.msra.mxu0 0.0
        %1133 = vmatprep.mubr.f32.mxu0 0.0
        %1134 = vmatmul.mubr.f32.gmra.mxu0 %v1067
        %v1135 = vpop.f32.mrf.mxu0
        %v1136 = vadd.f32 %v1065, %v1135
        %v1137 = vpop.f32.mrf.mxu0
        %1138 = vdwg.mxu0
        %v1139 = vld [vmem:[%s5] sm:$0xff]
        %v1140 = vld [vmem:[%s5 + $0x8] sm:$0xff]
        %v1141 = vld [vmem:[%s5 + $0x10] sm:$0xff]
        %v1142 = vld [vmem:[%s5 + $0x18] sm:$0xff]
        %v1143 = vld [vmem:[%s5 + $0x20] sm:$0xff]
        %v1144 = vld [vmem:[%s5 + $0x28] sm:$0xff]
        %v1145 = vld [vmem:[%s5 + $0x30] sm:$0xff]
        %v1146 = vld [vmem:[%s5 + $0x38] sm:$0xff]
        %v1147 = vld [vmem:[%s5 + $0x40] sm:$0xf]
        %v1149 = vsel %vm978, %v1052, 0
        %1151 = vmatprep.subr.mxu0 0.0
        %1152 = vmatpush1.msra.mxu0 0.0
        %1153 = vmatprep.subr.mxu0 0.0
        %1154 = vmatpush1.msra.mxu0 0.0
        %1155 = vmatprep.subr.mxu0 0.0
        %1156 = vmatpush1.msra.mxu0 0.0
        %1157 = vmatprep.subr.mxu0 0.0
        %1158 = vmatpush1.msra.mxu0 0.0
        %1159 = vmatprep.subr.mxu0 0.0
        %1160 = vmatpush1.msra.mxu0 0.0
        %1161 = vmatprep.subr.mxu0 0.0
        %1162 = vmatpush1.msra.mxu0 0.0
        %1163 = vmatprep.subr.mxu0 0.0
        %1164 = vmatpush1.msra.mxu0 0.0
        %1165 = vmatprep.subr.mxu0 0.0
        %1166 = vmatpush1.msra.mxu0 0.0
        %1167 = vmatprep.subr.mxu0 0.0
        %1168 = vmatpush1.msra.mxu0 %v1146
        %1169 = vmatprep.subr.mxu0 0.0
        %1170 = vmatpush1.msra.mxu0 %v1145
        %1171 = vmatprep.subr.mxu0 0.0
        %1172 = vmatpush1.msra.mxu0 %v1144
        %1173 = vmatprep.subr.mxu0 0.0
        %1174 = vmatpush1.msra.mxu0 %v1143
        %1175 = vmatprep.subr.mxu0 0.0
        %1176 = vmatpush1.msra.mxu0 %v1142
        %1177 = vmatprep.subr.mxu0 0.0
        %1178 = vmatpush1.msra.mxu0 %v1141
        %1179 = vmatprep.subr.mxu0 0.0
        %1180 = vmatpush1.msra.mxu0 %v1140
        %1181 = vmatprep.subr.mxu0 0.0
        %1182 = vmatpush1.msra.mxu0 %v1139
        %1183 = vmatprep.subr.mxu0 0.0
        %1184 = vmatpush2.msra.mxu0 0.0
        %1185 = vmatprep.subr.mxu0 0.0
        %1186 = vmatpush2.msra.mxu0 0.0
        %1187 = vmatprep.subr.mxu0 0.0
        %1188 = vmatpush2.msra.mxu0 0.0
        %1189 = vmatprep.subr.mxu0 0.0
        %1190 = vmatpush2.msra.mxu0 0.0
        %1191 = vmatprep.subr.mxu0 0.0
        %1192 = vmatpush2.msra.mxu0 0.0
        %1193 = vmatprep.subr.mxu0 0.0
        %1194 = vmatpush2.msra.mxu0 0.0
        %1195 = vmatprep.subr.mxu0 0.0
        %1196 = vmatpush2.msra.mxu0 0.0
        %1197 = vmatprep.subr.mxu0 0.0
        %1198 = vmatpush2.msra.mxu0 0.0
        %1199 = vmatprep.subr.mxu0 0.0
        %1200 = vmatpush2.msra.mxu0 0.0
        %1201 = vmatprep.subr.mxu0 0.0
        %1202 = vmatpush2.msra.mxu0 0.0
        %1203 = vmatprep.subr.mxu0 0.0
        %1204 = vmatpush2.msra.mxu0 0.0
        %1205 = vmatprep.subr.mxu0 0.0
        %1206 = vmatpush2.msra.mxu0 0.0
        %1207 = vmatprep.subr.mxu0 0.0
        %1208 = vmatpush2.msra.mxu0 0.0
        %1209 = vmatprep.subr.mxu0 0.0
        %1210 = vmatpush2.msra.mxu0 0.0
        %1211 = vmatprep.subr.mxu0 0.0
        %1212 = vmatpush2.msra.mxu0 0.0
        %1213 = vmatprep.subr.mxu0 0.0
        %1214 = vmatpush2.msra.mxu0 0.0
        %1215 = vmatprep.mubr.f32.mxu0 0.0
        %1216 = vmatmul.mubr.f32.gmra.mxu0 %v1149
        %v1217 = vpop.f32.mrf.mxu0
        %v1218 = vadd.f32 %v1147, %v1217
        %v1219 = vpop.f32.mrf.mxu0
        %1220 = vdwg.mxu0
        %v1222 = vsel %vm978, %v1136, 0
        %v1225 = vsel %vm978, %v1218, 0
        %1227 = vmatprep.subr.mxu0 0.0
        %1228 = vmatpush1.xpose.msra.mxu0 0.0
        %1229 = vmatprep.subr.mxu0 0.0
        %1230 = vmatpush1.xpose.msra.mxu0 0.0
        %1231 = vmatprep.subr.mxu0 0.0
        %1232 = vmatpush1.xpose.msra.mxu0 0.0
        %1233 = vmatprep.subr.mxu0 0.0
        %1234 = vmatpush1.xpose.msra.mxu0 0.0
        %1235 = vmatprep.subr.mxu0 0.0
        %1236 = vmatpush1.xpose.msra.mxu0 0.0
        %1237 = vmatprep.subr.mxu0 0.0
        %1238 = vmatpush1.xpose.msra.mxu0 0.0
        %1239 = vmatprep.subr.mxu0 0.0
        %1240 = vmatpush1.xpose.msra.mxu0 0.0
        %1241 = vmatprep.subr.mxu0 0.0
        %1242 = vmatpush1.xpose.msra.mxu0 0.0
        %1243 = vmatprep.subr.mxu0 0.0
        %1244 = vmatpush1.xpose.msra.mxu0 0.0
        %1245 = vmatprep.subr.mxu0 0.0
        %1246 = vmatpush1.xpose.msra.mxu0 0.0
        %1247 = vmatprep.subr.mxu0 0.0
        %1248 = vmatpush1.xpose.msra.mxu0 0.0
        %1249 = vmatprep.subr.mxu0 0.0
        %1250 = vmatpush1.xpose.msra.mxu0 0.0
        %1251 = vmatprep.subr.mxu0 0.0
        %1252 = vmatpush1.xpose.msra.mxu0 0.0
        %1253 = vmatprep.subr.mxu0 0.0
        %1254 = vmatpush1.xpose.msra.mxu0 0.0
        %1255 = vmatprep.subr.mxu0 0.0
        %1256 = vmatpush1.xpose.msra.mxu0 0.0
        %1257 = vmatprep.subr.mxu0 0.0
        %1258 = vmatpush1.xpose.msra.mxu0 %v1225
        %1259 = vmatprep.subr.mxu0 0.0
        %1260 = vmatpush2.xpose.msra.mxu0 0.0
        %1261 = vmatprep.subr.mxu0 0.0
        %1262 = vmatpush2.xpose.msra.mxu0 0.0
        %1263 = vmatprep.subr.mxu0 0.0
        %1264 = vmatpush2.xpose.msra.mxu0 0.0
        %1265 = vmatprep.subr.mxu0 0.0
        %1266 = vmatpush2.xpose.msra.mxu0 0.0
        %1267 = vmatprep.subr.mxu0 0.0
        %1268 = vmatpush2.xpose.msra.mxu0 0.0
        %1269 = vmatprep.subr.mxu0 0.0
        %1270 = vmatpush2.xpose.msra.mxu0 0.0
        %1271 = vmatprep.subr.mxu0 0.0
        %1272 = vmatpush2.xpose.msra.mxu0 0.0
        %1273 = vmatprep.subr.mxu0 0.0
        %1274 = vmatpush2.xpose.msra.mxu0 0.0
        %1275 = vmatprep.subr.mxu0 0.0
        %1276 = vmatpush2.xpose.msra.mxu0 0.0
        %1277 = vmatprep.subr.mxu0 0.0
        %1278 = vmatpush2.xpose.msra.mxu0 0.0
        %1279 = vmatprep.subr.mxu0 0.0
        %1280 = vmatpush2.xpose.msra.mxu0 0.0
        %1281 = vmatprep.subr.mxu0 0.0
        %1282 = vmatpush2.xpose.msra.mxu0 0.0
        %1283 = vmatprep.subr.mxu0 0.0
        %1284 = vmatpush2.xpose.msra.mxu0 0.0
        %1285 = vmatprep.subr.mxu0 0.0
        %1286 = vmatpush2.xpose.msra.mxu0 0.0
        %1287 = vmatprep.subr.mxu0 0.0
        %1288 = vmatpush2.xpose.msra.mxu0 0.0
        %1289 = vmatprep.subr.mxu0 0.0
        %1290 = vmatpush2.xpose.msra.mxu0 0.0
        %1291 = vmatprep.mubr.f32.mxu0 0.0
        %1292 = vmatmul.mubr.f32.gmra.mxu0 %v1222
        %v1293 = vpop.f32.mrf.mxu0
        %v1294 = vadd.f32 0.0, %v1293
        %v1295 = vpop.f32.mrf.mxu0
        %1296 = vdwg.mxu0
        %vm1297 = vcmask 26624
        %v1298 = vsel %vm1297, %v1294, -inf
        %1299 = vmax.xlane.f32.xlu0 %v1298
        %v1300 = vpop.xlane.xlu0 %1299
        %v1301 = vsub.f32 %v1294, %v1300
        %v1302 = vmul.f32 %v1301, 1.442695
        %v1303 = vpow.pop %v1302
        %v1304 = vsel %vm1297, %v1303, 0.0
        %1305 = vadd.xlane.f32.xlu0 %v1304
        %v1306 = vpop.xlane.xlu0 %1305
        %v1307 = vrcp.pop %v1306
        %v1308 = vmul.f32 %v1303, %v1307
        %1309 = vrot.lane.b32.xlu0 %v1218, 64
        %v1310 = vpop.permute.xlu0 %1309
        %vm1311 = vcmask 31744
        %v1313 = vsel %vm1311, %v1308, 0
        %vm1315 = vcmask 1043456
        %v1316 = vsel %vm1315, %v1310, 0
        %1318 = vmatprep.subr.mxu0 0.0
        %1319 = vmatpush1.msra.mxu0 0.0
        %1320 = vmatprep.subr.mxu0 0.0
        %1321 = vmatpush1.msra.mxu0 0.0
        %1322 = vmatprep.subr.mxu0 0.0
        %1323 = vmatpush1.msra.mxu0 0.0
        %1324 = vmatprep.subr.mxu0 0.0
        %1325 = vmatpush1.msra.mxu0 0.0
        %1326 = vmatprep.subr.mxu0 0.0
        %1327 = vmatpush1.msra.mxu0 0.0
        %1328 = vmatprep.subr.mxu0 0.0
        %1329 = vmatpush1.msra.mxu0 0.0
        %1330 = vmatprep.subr.mxu0 0.0
        %1331 = vmatpush1.msra.mxu0 0.0
        %1332 = vmatprep.subr.mxu0 0.0
        %1333 = vmatpush1.msra.mxu0 0.0
        %1334 = vmatprep.subr.mxu0 0.0
        %1335 = vmatpush1.msra.mxu0 0.0
        %1336 = vmatprep.subr.mxu0 0.0
        %1337 = vmatpush1.msra.mxu0 0.0
        %1338 = vmatprep.subr.mxu0 0.0
        %1339 = vmatpush1.msra.mxu0 0.0
        %1340 = vmatprep.subr.mxu0 0.0
        %1341 = vmatpush1.msra.mxu0 0.0
        %1342 = vmatprep.subr.mxu0 0.0
        %1343 = vmatpush1.msra.mxu0 0.0
        %1344 = vmatprep.subr.mxu0 0.0
        %1345 = vmatpush1.msra.mxu0 0.0
        %1346 = vmatprep.subr.mxu0 0.0
        %1347 = vmatpush1.msra.mxu0 0.0
        %1348 = vmatprep.subr.mxu0 0.0
        %1349 = vmatpush1.msra.mxu0 %v1316
        %1350 = vmatprep.subr.mxu0 0.0
        %1351 = vmatpush2.msra.mxu0 0.0
        %1352 = vmatprep.subr.mxu0 0.0
        %1353 = vmatpush2.msra.mxu0 0.0
        %1354 = vmatprep.subr.mxu0 0.0
        %1355 = vmatpush2.msra.mxu0 0.0
        %1356 = vmatprep.subr.mxu0 0.0
        %1357 = vmatpush2.msra.mxu0 0.0
        %1358 = vmatprep.subr.mxu0 0.0
        %1359 = vmatpush2.msra.mxu0 0.0
        %1360 = vmatprep.subr.mxu0 0.0
        %1361 = vmatpush2.msra.mxu0 0.0
        %1362 = vmatprep.subr.mxu0 0.0
        %1363 = vmatpush2.msra.mxu0 0.0
        %1364 = vmatprep.subr.mxu0 0.0
        %1365 = vmatpush2.msra.mxu0 0.0
        %1366 = vmatprep.subr.mxu0 0.0
        %1367 = vmatpush2.msra.mxu0 0.0
        %1368 = vmatprep.subr.mxu0 0.0
        %1369 = vmatpush2.msra.mxu0 0.0
        %1370 = vmatprep.subr.mxu0 0.0
        %1371 = vmatpush2.msra.mxu0 0.0
        %1372 = vmatprep.subr.mxu0 0.0
        %1373 = vmatpush2.msra.mxu0 0.0
        %1374 = vmatprep.subr.mxu0 0.0
        %1375 = vmatpush2.msra.mxu0 0.0
        %1376 = vmatprep.subr.mxu0 0.0
        %1377 = vmatpush2.msra.mxu0 0.0
        %1378 = vmatprep.subr.mxu0 0.0
        %1379 = vmatpush2.msra.mxu0 0.0
        %1380 = vmatprep.subr.mxu0 0.0
        %1381 = vmatpush2.msra.mxu0 0.0
        %1382 = vmatprep.mubr.f32.mxu0 0.0
        %1383 = vmatmul.mubr.f32.gmra.mxu0 %v1313
        %v1384 = vpop.f32.mrf.mxu0
        %v1385 = vadd.f32 0.0, %v1384
        %v1386 = vpop.f32.mrf.mxu0
        %1387 = vdwg.mxu0
        %v1388 = vld [vmem:[%s4 + $0x380] sm:$0xff]
        %v1389 = vld [vmem:[%s4 + $0x388] sm:$0xff]
        %v1390 = vld [vmem:[%s4 + $0x390] sm:$0xff]
        %v1391 = vld [vmem:[%s4 + $0x398] sm:$0xff]
        %v1392 = vld [vmem:[%s4 + $0x3a0] sm:$0xff]
        %v1393 = vld [vmem:[%s4 + $0x3a8] sm:$0xff]
        %v1394 = vld [vmem:[%s4 + $0x3b0] sm:$0xff]
        %v1395 = vld [vmem:[%s4 + $0x3b8] sm:$0xff]
        %v1397 = vsel %vm978, %v1385, 0
        %1399 = vmatprep.subr.mxu0 0.0
        %1400 = vmatpush1.msra.mxu0 0.0
        %1401 = vmatprep.subr.mxu0 0.0
        %1402 = vmatpush1.msra.mxu0 0.0
        %1403 = vmatprep.subr.mxu0 0.0
        %1404 = vmatpush1.msra.mxu0 0.0
        %1405 = vmatprep.subr.mxu0 0.0
        %1406 = vmatpush1.msra.mxu0 0.0
        %1407 = vmatprep.subr.mxu0 0.0
        %1408 = vmatpush1.msra.mxu0 0.0
        %1409 = vmatprep.subr.mxu0 0.0
        %1410 = vmatpush1.msra.mxu0 0.0
        %1411 = vmatprep.subr.mxu0 0.0
        %1412 = vmatpush1.msra.mxu0 0.0
        %1413 = vmatprep.subr.mxu0 0.0
        %1414 = vmatpush1.msra.mxu0 0.0
        %1415 = vmatprep.subr.mxu0 0.0
        %1416 = vmatpush1.msra.mxu0 %v1395
        %1417 = vmatprep.subr.mxu0 0.0
        %1418 = vmatpush1.msra.mxu0 %v1394
        %1419 = vmatprep.subr.mxu0 0.0
        %1420 = vmatpush1.msra.mxu0 %v1393
        %1421 = vmatprep.subr.mxu0 0.0
        %1422 = vmatpush1.msra.mxu0 %v1392
        %1423 = vmatprep.subr.mxu0 0.0
        %1424 = vmatpush1.msra.mxu0 %v1391
        %1425 = vmatprep.subr.mxu0 0.0
        %1426 = vmatpush1.msra.mxu0 %v1390
        %1427 = vmatprep.subr.mxu0 0.0
        %1428 = vmatpush1.msra.mxu0 %v1389
        %1429 = vmatprep.subr.mxu0 0.0
        %1430 = vmatpush1.msra.mxu0 %v1388
        %1431 = vmatprep.subr.mxu0 0.0
        %1432 = vmatpush2.msra.mxu0 0.0
        %1433 = vmatprep.subr.mxu0 0.0
        %1434 = vmatpush2.msra.mxu0 0.0
        %1435 = vmatprep.subr.mxu0 0.0
        %1436 = vmatpush2.msra.mxu0 0.0
        %1437 = vmatprep.subr.mxu0 0.0
        %1438 = vmatpush2.msra.mxu0 0.0
        %1439 = vmatprep.subr.mxu0 0.0
        %1440 = vmatpush2.msra.mxu0 0.0
        %1441 = vmatprep.subr.mxu0 0.0
        %1442 = vmatpush2.msra.mxu0 0.0
        %1443 = vmatprep.subr.mxu0 0.0
        %1444 = vmatpush2.msra.mxu0 0.0
        %1445 = vmatprep.subr.mxu0 0.0
        %1446 = vmatpush2.msra.mxu0 0.0
        %1447 = vmatprep.subr.mxu0 0.0
        %1448 = vmatpush2.msra.mxu0 0.0
        %1449 = vmatprep.subr.mxu0 0.0
        %1450 = vmatpush2.msra.mxu0 0.0
        %1451 = vmatprep.subr.mxu0 0.0
        %1452 = vmatpush2.msra.mxu0 0.0
        %1453 = vmatprep.subr.mxu0 0.0
        %1454 = vmatpush2.msra.mxu0 0.0
        %1455 = vmatprep.subr.mxu0 0.0
        %1456 = vmatpush2.msra.mxu0 0.0
        %1457 = vmatprep.subr.mxu0 0.0
        %1458 = vmatpush2.msra.mxu0 0.0
        %1459 = vmatprep.subr.mxu0 0.0
        %1460 = vmatpush2.msra.mxu0 0.0
        %1461 = vmatprep.subr.mxu0 0.0
        %1462 = vmatpush2.msra.mxu0 0.0
        %1463 = vmatprep.mubr.f32.mxu0 0.0
        %1464 = vmatmul.mubr.f32.gmra.mxu0 %v1397
        %v1465 = vpop.f32.mrf.mxu0
        %v1466 = vadd.f32 0.0, %v1465
        %v1467 = vpop.f32.mrf.mxu0
        %1468 = vdwg.mxu0
        %v1469 = vadd.f32 %v1053, %v1466
        %v1470 = vlaneseq
        %v1471 = vshrl.u32 %v1470, 7
        %v1472 = vsub.s32 3, %v1471
        %v1473 = vrot.slane %v355, %v1472
        %v1474 = vadd.f32 %v1469, %v1473
        %v1475 = vld [vmem:[%s4 + $0x3c0] sm:$0xff]
        %v1476 = vld [vmem:[%s4 + $0x3c8] sm:$0xff]
        %v1477 = vld [vmem:[%s4 + $0x3d0] sm:$0xff]
        %v1478 = vld [vmem:[%s4 + $0x3d8] sm:$0xff]
        %v1479 = vld [vmem:[%s4 + $0x3e0] sm:$0xff]
        %v1480 = vld [vmem:[%s4 + $0x3e8] sm:$0xff]
        %v1481 = vld [vmem:[%s4 + $0x3f0] sm:$0xff]
        %v1482 = vld [vmem:[%s4 + $0x3f8] sm:$0xff]
        %v1484 = vrot.slane %v355, 4
        %v1487 = vsel %vm978, %v1474, 0
        %1489 = vmatprep.subr.mxu0 0.0
        %1490 = vmatpush1.msra.mxu0 0.0
        %1491 = vmatprep.subr.mxu0 0.0
        %1492 = vmatpush1.msra.mxu0 0.0
        %1493 = vmatprep.subr.mxu0 0.0
        %1494 = vmatpush1.msra.mxu0 0.0
        %1495 = vmatprep.subr.mxu0 0.0
        %1496 = vmatpush1.msra.mxu0 0.0
        %1497 = vmatprep.subr.mxu0 0.0
        %1498 = vmatpush1.msra.mxu0 0.0
        %1499 = vmatprep.subr.mxu0 0.0
        %1500 = vmatpush1.msra.mxu0 0.0
        %1501 = vmatprep.subr.mxu0 0.0
        %1502 = vmatpush1.msra.mxu0 0.0
        %1503 = vmatprep.subr.mxu0 0.0
        %1504 = vmatpush1.msra.mxu0 0.0
        %1505 = vmatprep.subr.mxu0 0.0
        %1506 = vmatpush1.msra.mxu0 %v1482
        %1507 = vmatprep.subr.mxu0 0.0
        %1508 = vmatpush1.msra.mxu0 %v1481
        %1509 = vmatprep.subr.mxu0 0.0
        %1510 = vmatpush1.msra.mxu0 %v1480
        %1511 = vmatprep.subr.mxu0 0.0
        %1512 = vmatpush1.msra.mxu0 %v1479
        %1513 = vmatprep.subr.mxu0 0.0
        %1514 = vmatpush1.msra.mxu0 %v1478
        %1515 = vmatprep.subr.mxu0 0.0
        %1516 = vmatpush1.msra.mxu0 %v1477
        %1517 = vmatprep.subr.mxu0 0.0
        %1518 = vmatpush1.msra.mxu0 %v1476
        %1519 = vmatprep.subr.mxu0 0.0
        %1520 = vmatpush1.msra.mxu0 %v1475
        %1521 = vmatprep.subr.mxu0 0.0
        %1522 = vmatpush2.msra.mxu0 0.0
        %1523 = vmatprep.subr.mxu0 0.0
        %1524 = vmatpush2.msra.mxu0 0.0
        %1525 = vmatprep.subr.mxu0 0.0
        %1526 = vmatpush2.msra.mxu0 0.0
        %1527 = vmatprep.subr.mxu0 0.0
        %1528 = vmatpush2.msra.mxu0 0.0
        %1529 = vmatprep.subr.mxu0 0.0
        %1530 = vmatpush2.msra.mxu0 0.0
        %1531 = vmatprep.subr.mxu0 0.0
        %1532 = vmatpush2.msra.mxu0 0.0
        %1533 = vmatprep.subr.mxu0 0.0
        %1534 = vmatpush2.msra.mxu0 0.0
        %1535 = vmatprep.subr.mxu0 0.0
        %1536 = vmatpush2.msra.mxu0 0.0
        %1537 = vmatprep.subr.mxu0 0.0
        %1538 = vmatpush2.msra.mxu0 0.0
        %1539 = vmatprep.subr.mxu0 0.0
        %1540 = vmatpush2.msra.mxu0 0.0
        %1541 = vmatprep.subr.mxu0 0.0
        %1542 = vmatpush2.msra.mxu0 0.0
        %1543 = vmatprep.subr.mxu0 0.0
        %1544 = vmatpush2.msra.mxu0 0.0
        %1545 = vmatprep.subr.mxu0 0.0
        %1546 = vmatpush2.msra.mxu0 0.0
        %1547 = vmatprep.subr.mxu0 0.0
        %1548 = vmatpush2.msra.mxu0 0.0
        %1549 = vmatprep.subr.mxu0 0.0
        %1550 = vmatpush2.msra.mxu0 0.0
        %1551 = vmatprep.subr.mxu0 0.0
        %1552 = vmatpush2.msra.mxu0 0.0
        %1553 = vmatprep.mubr.f32.mxu0 0.0
        %1554 = vmatmul.mubr.f32.gmra.mxu0 %v1487
        %v1555 = vpop.f32.mrf.mxu0
        %v1556 = vadd.f32 %v1484, %v1555
        %v1557 = vpop.f32.mrf.mxu0
        %1558 = vdwg.mxu0
        %v1559 = vmax.f32 %v1556, 0.0
        %v1560 = vld [vmem:[%s4 + $0x400] sm:$0xff]
        %v1561 = vld [vmem:[%s4 + $0x408] sm:$0xff]
        %v1562 = vld [vmem:[%s4 + $0x410] sm:$0xff]
        %v1563 = vld [vmem:[%s4 + $0x418] sm:$0xff]
        %v1564 = vld [vmem:[%s4 + $0x420] sm:$0xff]
        %v1565 = vld [vmem:[%s4 + $0x428] sm:$0xff]
        %v1566 = vld [vmem:[%s4 + $0x430] sm:$0xff]
        %v1567 = vld [vmem:[%s4 + $0x438] sm:$0xff]
        %v1568 = vrot.slane %v355, 5
        %v1571 = vsel %vm978, %v1559, 0
        %1573 = vmatprep.subr.mxu0 0.0
        %1574 = vmatpush1.msra.mxu0 0.0
        %1575 = vmatprep.subr.mxu0 0.0
        %1576 = vmatpush1.msra.mxu0 0.0
        %1577 = vmatprep.subr.mxu0 0.0
        %1578 = vmatpush1.msra.mxu0 0.0
        %1579 = vmatprep.subr.mxu0 0.0
        %1580 = vmatpush1.msra.mxu0 0.0
        %1581 = vmatprep.subr.mxu0 0.0
        %1582 = vmatpush1.msra.mxu0 0.0
        %1583 = vmatprep.subr.mxu0 0.0
        %1584 = vmatpush1.msra.mxu0 0.0
        %1585 = vmatprep.subr.mxu0 0.0
        %1586 = vmatpush1.msra.mxu0 0.0
        %1587 = vmatprep.subr.mxu0 0.0
        %1588 = vmatpush1.msra.mxu0 0.0
        %1589 = vmatprep.subr.mxu0 0.0
        %1590 = vmatpush1.msra.mxu0 %v1567
        %1591 = vmatprep.subr.mxu0 0.0
        %1592 = vmatpush1.msra.mxu0 %v1566
        %1593 = vmatprep.subr.mxu0 0.0
        %1594 = vmatpush1.msra.mxu0 %v1565
        %1595 = vmatprep.subr.mxu0 0.0
        %1596 = vmatpush1.msra.mxu0 %v1564
        %1597 = vmatprep.subr.mxu0 0.0
        %1598 = vmatpush1.msra.mxu0 %v1563
        %1599 = vmatprep.subr.mxu0 0.0
        %1600 = vmatpush1.msra.mxu0 %v1562
        %1601 = vmatprep.subr.mxu0 0.0
        %1602 = vmatpush1.msra.mxu0 %v1561
        %1603 = vmatprep.subr.mxu0 0.0
        %1604 = vmatpush1.msra.mxu0 %v1560
        %1605 = vmatprep.subr.mxu0 0.0
        %1606 = vmatpush2.msra.mxu0 0.0
        %1607 = vmatprep.subr.mxu0 0.0
        %1608 = vmatpush2.msra.mxu0 0.0
        %1609 = vmatprep.subr.mxu0 0.0
        %1610 = vmatpush2.msra.mxu0 0.0
        %1611 = vmatprep.subr.mxu0 0.0
        %1612 = vmatpush2.msra.mxu0 0.0
        %1613 = vmatprep.subr.mxu0 0.0
        %1614 = vmatpush2.msra.mxu0 0.0
        %1615 = vmatprep.subr.mxu0 0.0
        %1616 = vmatpush2.msra.mxu0 0.0
        %1617 = vmatprep.subr.mxu0 0.0
        %1618 = vmatpush2.msra.mxu0 0.0
        %1619 = vmatprep.subr.mxu0 0.0
        %1620 = vmatpush2.msra.mxu0 0.0
        %1621 = vmatprep.subr.mxu0 0.0
        %1622 = vmatpush2.msra.mxu0 0.0
        %1623 = vmatprep.subr.mxu0 0.0
        %1624 = vmatpush2.msra.mxu0 0.0
        %1625 = vmatprep.subr.mxu0 0.0
        %1626 = vmatpush2.msra.mxu0 0.0
        %1627 = vmatprep.subr.mxu0 0.0
        %1628 = vmatpush2.msra.mxu0 0.0
        %1629 = vmatprep.subr.mxu0 0.0
        %1630 = vmatpush2.msra.mxu0 0.0
        %1631 = vmatprep.subr.mxu0 0.0
        %1632 = vmatpush2.msra.mxu0 0.0
        %1633 = vmatprep.subr.mxu0 0.0
        %1634 = vmatpush2.msra.mxu0 0.0
        %1635 = vmatprep.subr.mxu0 0.0
        %1636 = vmatpush2.msra.mxu0 0.0
        %1637 = vmatprep.mubr.f32.mxu0 0.0
        %1638 = vmatmul.mubr.f32.gmra.mxu0 %v1571
        %v1639 = vpop.f32.mrf.mxu0
        %v1640 = vadd.f32 %v1568, %v1639
        %v1641 = vpop.f32.mrf.mxu0
        %1642 = vdwg.mxu0
        %v1643 = vrot.slane %v355, 6
        %v1645 = vmul.f32 %v1559, %v1643
        %vm1646 = vcmask 516096
        %v1647 = vsel %vm1646, %v1645, 0.0
        %1648 = vadd.xlane.f32.xlu0 %v1647
        %v1649 = vpop.xlane.xlu0 %1648
        %s1650 = sld [smem:[#allocation2 + $0x4]]
        %v1651 = vstv %s1650
        %v1652 = vadd.f32 %v1649, %v1651
        %v1654 = vsel %vm978, %v1640, 0
        %1656 = vmatprep.subr.mxu0 0.0
        %1657 = vmatpush1.xpose.msra.mxu0 0.0
        %1658 = vmatprep.subr.mxu0 0.0
        %1659 = vmatpush1.xpose.msra.mxu0 0.0
        %1660 = vmatprep.subr.mxu0 0.0
        %1661 = vmatpush1.xpose.msra.mxu0 0.0
        %1662 = vmatprep.subr.mxu0 0.0
        %1663 = vmatpush1.xpose.msra.mxu0 0.0
        %1664 = vmatprep.subr.mxu0 0.0
        %1665 = vmatpush1.xpose.msra.mxu0 0.0
        %1666 = vmatprep.subr.mxu0 0.0
        %1667 = vmatpush1.xpose.msra.mxu0 0.0
        %1668 = vmatprep.subr.mxu0 0.0
        %1669 = vmatpush1.xpose.msra.mxu0 0.0
        %1670 = vmatprep.subr.mxu0 0.0
        %1671 = vmatpush1.xpose.msra.mxu0 0.0
        %1672 = vmatprep.subr.mxu0 0.0
        %1673 = vmatpush1.xpose.msra.mxu0 0.0
        %1674 = vmatprep.subr.mxu0 0.0
        %1675 = vmatpush1.xpose.msra.mxu0 0.0
        %1676 = vmatprep.subr.mxu0 0.0
        %1677 = vmatpush1.xpose.msra.mxu0 0.0
        %1678 = vmatprep.subr.mxu0 0.0
        %1679 = vmatpush1.xpose.msra.mxu0 0.0
        %1680 = vmatprep.subr.mxu0 0.0
        %1681 = vmatpush1.xpose.msra.mxu0 0.0
        %1682 = vmatprep.subr.mxu0 0.0
        %1683 = vmatpush1.xpose.msra.mxu0 0.0
        %1684 = vmatprep.subr.mxu0 0.0
        %1685 = vmatpush1.xpose.msra.mxu0 0.0
        %1686 = vmatprep.subr.mxu0 0.0
        %1687 = vmatpush1.xpose.msra.mxu0 %v1149
        %1688 = vmatprep.subr.mxu0 0.0
        %1689 = vmatpush2.xpose.msra.mxu0 0.0
        %1690 = vmatprep.subr.mxu0 0.0
        %1691 = vmatpush2.xpose.msra.mxu0 0.0
        %1692 = vmatprep.subr.mxu0 0.0
        %1693 = vmatpush2.xpose.msra.mxu0 0.0
        %1694 = vmatprep.subr.mxu0 0.0
        %1695 = vmatpush2.xpose.msra.mxu0 0.0
        %1696 = vmatprep.subr.mxu0 0.0
        %1697 = vmatpush2.xpose.msra.mxu0 0.0
        %1698 = vmatprep.subr.mxu0 0.0
        %1699 = vmatpush2.xpose.msra.mxu0 0.0
        %1700 = vmatprep.subr.mxu0 0.0
        %1701 = vmatpush2.xpose.msra.mxu0 0.0
        %1702 = vmatprep.subr.mxu0 0.0
        %1703 = vmatpush2.xpose.msra.mxu0 0.0
        %1704 = vmatprep.subr.mxu0 0.0
        %1705 = vmatpush2.xpose.msra.mxu0 0.0
        %1706 = vmatprep.subr.mxu0 0.0
        %1707 = vmatpush2.xpose.msra.mxu0 0.0
        %1708 = vmatprep.subr.mxu0 0.0
        %1709 = vmatpush2.xpose.msra.mxu0 0.0
        %1710 = vmatprep.subr.mxu0 0.0
        %1711 = vmatpush2.xpose.msra.mxu0 0.0
        %1712 = vmatprep.subr.mxu0 0.0
        %1713 = vmatpush2.xpose.msra.mxu0 0.0
        %1714 = vmatprep.subr.mxu0 0.0
        %1715 = vmatpush2.xpose.msra.mxu0 0.0
        %1716 = vmatprep.subr.mxu0 0.0
        %1717 = vmatpush2.xpose.msra.mxu0 0.0
        %1718 = vmatprep.subr.mxu0 0.0
        %1719 = vmatpush2.xpose.msra.mxu0 0.0
        %1720 = vmatprep.mubr.f32.mxu0 0.0
        %1721 = vmatmul.mubr.f32.gmra.mxu0 %v1654
        %v1722 = vpop.f32.mrf.mxu0
        %v1723 = vadd.f32 0.0, %v1722
        %v1724 = vpop.f32.mrf.mxu0
        %1725 = vdwg.mxu0
        %v1726 = vld [vmem:[%s7] sm:$0xff]
        %v1727 = vld [vmem:[%s7 + $0x8] sm:$0xff]
        %v1728 = vld [vmem:[%s7 + $0x10] sm:$0xff]
        %v1729 = vld [vmem:[%s7 + $0x18] sm:$0xff]
        %s1731 = vtos %v1723
        %v1732 = vstv %s1731
        %v1734 = vmul.f32 %v1732, %v1726
        %1735 = vrot.lane.b32.xlu0 %v1723, 127
        %v1736 = vpop.permute.xlu0 %1735
        %s1737 = vtos %v1736
        %v1738 = vstv %s1737
        %v1740 = vmul.f32 %v1738, %v1727
        %v1741 = vadd.f32 %v1734, %v1740
        %1742 = vrot.lane.b32.xlu0 %v1723, 126
        %v1743 = vpop.permute.xlu0 %1742
        %s1744 = vtos %v1743
        %v1745 = vstv %s1744
        %v1747 = vmul.f32 %v1745, %v1728
        %v1748 = vadd.f32 %v1741, %v1747
        %1749 = vrot.lane.b32.xlu0 %v1723, 125
        %v1750 = vpop.permute.xlu0 %1749
        %s1751 = vtos %v1750
        %v1752 = vstv %s1751
        %v1754 = vmul.f32 %v1752, %v1729
        %v1755 = vadd.f32 %v1748, %v1754
        %v1756 = vlaneseq
        %v1757 = vshrl.u32 %v1756, 7
        %v1758 = vsub.s32 0, %v1757
        %v1759 = vrot.slane %v1652, %v1758
        %v1760 = vadd.f32 %v1755, %v1759
        %1761 = vst [vmem:[%s354] sm:$0xff] %v1760
        %p1762 = scmp.lt.s32.totalorder %s20, 1
        %s1763 = scalar_select %p1762, %s20, 1
        %s1764 = smul.addr %s1763, 8
        %s1765 = scalar_lea.vmem %s8, %s1764
        // Predicated region
        $region57: #{glom_sam_forward.1} parent=51 // pred_check
          %p1766 = pneg %p221
        $region58: #{glom_sam_forward.1} parent=51 // pred_check_branch
          %1768 = sbr.rel (%p1766) target = $region60
        $region59: #{glom_sam_forward.1} parent=51 // pred_region
          _
        $region60: #{glom_sam_forward.1} parent=51 // pred_fallthru
          _
      $region52: #{glom_sam_forward.1} parent=5 // pred_fallthru
        _
      %p1769 = scmp.le.s32.totalorder 2, %s15
      // Predicated region
      $region61: #{glom_sam_forward.1} parent=5 // pred_check
        %p1770 = pneg %p1769
      $region62: #{glom_sam_forward.1} parent=5 // pred_check_branch
        %1772 = sbr.rel (%p1770) target = $region64
      $region63: #{glom_sam_forward.1} parent=5 // pred_region
        %s1773 = ssub.s32 %s15, 2
        // Predicated region
        $region65: #{glom_sam_forward.1} parent=63 // pred_check
          %p1774 = pneg %p227
        $region66: #{glom_sam_forward.1} parent=63 // pred_check_branch
          %1776 = sbr.rel (%p1774) target = $region68
        $region67: #{glom_sam_forward.1} parent=63 // pred_region
          %p1777 = scmp.lt.s32.totalorder %s21, 1
          %s1778 = scalar_select %p1777, %s21, 1
          %s1779 = smul.addr %s1778, 8
          %s1780 = scalar_lea.vmem %s8, %s1779
        $region68: #{glom_sam_forward.1} parent=63 // pred_fallthru
          _
      $region64: #{glom_sam_forward.1} parent=5 // pred_fallthru
        _
    $region6: #{glom_sam_forward.1} parent=1 // loop_footer
      %s19 = sadd.s32 1, %s15
    $region7: #{glom_sam_forward.1} parent=1 // loop_footer_branch
      %14 = sbr.rel target = $region3
    $region8: #{glom_sam_forward.1} parent=1 // loop_exit
      _
    %1781 = vsyncpa [#allocation3], 1
    %s1782 = scalar_lea.sflag [#allocation3], 1
    %1783 = vsyncpa %s1782, 1

</llo_original>
